<compile_context>
chip_gen: v6e
topology: v6e:2x2x1
jax: 0.10.0
libtpu: 0.0.40
codegen_flags: <defaults>
</compile_context>

<pallas_src>
import jax
import jax.numpy as jnp
from jax.experimental import pallas as pl
from jax.experimental.pallas import tpu as pltpu


# ----------------------------- kernel helpers -----------------------------

def _layernorm(x, gamma, beta, eps=1e-5):
    mu = jnp.mean(x, axis=-1, keepdims=True)
    var = jnp.mean((x - mu) ** 2, axis=-1, keepdims=True)
    return (x - mu) * jax.lax.rsqrt(var + eps) * gamma + beta


# ----------------------------- fused encoder kernel -----------------------------

def fused_encoder_kernel(a_ref, x_ref, pool_ref, w1_ref, wpack_ref, wm3t_ref,
                         slab_ref, temps_ref, wt_hbm_ref, cls_hbm_ref,
                         out_ref, wt_vmem, cls_vmem, dma_sem):
    f32, bf16 = jnp.float32, jnp.bfloat16
    H = wpack_ref.shape[0]          # graph_hidden == nhid
    nout = wm3t_ref.shape[0]

    # Kick off the text-branch DMAs immediately; they complete under the
    # serially-dependent graph chain and are awaited just before the text dot.
    wt_cp = pltpu.make_async_copy(wt_hbm_ref, wt_vmem, dma_sem.at[0])
    cls_cp = pltpu.make_async_copy(cls_hbm_ref, cls_vmem, dma_sem.at[1])
    wt_cp.start()
    cls_cp.start()

    # Scalar (SMEM) reads before any DMA wait.
    temp_g = temps_ref[0]
    temp_t = temps_ref[1]

    # Bias / LayerNorm slab (one DMA instead of eleven).
    slab = slab_ref[...]                                 # (11, H) f32
    b1, b2, b3 = slab[0:1, :H], slab[1:2, :H], slab[2:3, :H]
    bm1, bm2 = slab[3:4, :H], slab[4:5, :H]
    bm3, g_ln_g, g_ln_b = slab[5:6, :nout], slab[6:7, :nout], slab[7:8, :nout]
    bt, t_ln_g, t_ln_b = slab[8:9, :nout], slab[9:10, :nout], slab[10:11, :nout]

    a = a_ref[...]                                       # (N, N) bf16 normalized adjacency

    # GCNConv1 + ReLU:  relu((A @ X) @ W1 + b1)   (contract through F < H first)
    ax = jnp.dot(a, x_ref[...], preferred_element_type=f32)                      # (N, F)
    h = jnp.maximum(
        jnp.dot(ax.astype(bf16), w1_ref[...], preferred_element_type=f32) + b1, 0.0)

    # GCNConv2 + ReLU:  relu(A @ (h @ W2) + b2)
    hw = jnp.dot(h.astype(bf16), wpack_ref[:, 0:H], preferred_element_type=f32)
    h = jnp.maximum(
        jnp.dot(a, hw.astype(bf16), preferred_element_type=f32) + b2, 0.0)

    # GCNConv3 fused with global_mean_pool:  g = (pool @ A) @ (h @ W3) + b3
    # (exact: each non-empty graph's pool row sums to 1; no empty graphs assumed)
    pa = jnp.dot(pool_ref[...], a, preferred_element_type=f32)                   # (Bg, N)
    hw = jnp.dot(h.astype(bf16), wpack_ref[:, H:2 * H], preferred_element_type=f32)
    g = jnp.dot(pa.astype(bf16), hw.astype(bf16), preferred_element_type=f32) + b3

    # MLP head
    g = jnp.maximum(
        jnp.dot(g.astype(bf16), wpack_ref[:, 2 * H:3 * H],
                preferred_element_type=f32) + bm1, 0.0)
    g = jnp.maximum(
        jnp.dot(g.astype(bf16), wpack_ref[:, 3 * H:4 * H],
                preferred_element_type=f32) + bm2, 0.0)
    # lane-dense transposed wm3: contract H of both operands (trans_b matmul)
    g = jax.lax.dot_general(g.astype(bf16), wm3t_ref[...],
                            dimension_numbers=(((1,), (1,)), ((), ())),
                            preferred_element_type=f32) + bm3                    # (Bg, nout)

    g = _layernorm(g, g_ln_g, g_ln_b) * jnp.exp(temp_g)

    # Text branch: Linear(768 -> nout) with lane-dense transposed weight.
    wt_cp.wait()
    cls_cp.wait()
    t = jax.lax.dot_general(cls_vmem[...], wt_vmem[...],
                            dimension_numbers=(((1,), (1,)), ((), ())),
                            preferred_element_type=f32) + bt                     # (Bt, nout)
    t = _layernorm(t, t_ln_g, t_ln_b) * jnp.exp(temp_t)

    # One combined output store (reductions above used logical nout width).
    out_ref[...] = jnp.concatenate([g, t], axis=0)


# ----------------------------- wrapper -----------------------------

def pack_params(gp, tp):
    """Hoisted parameter packing: call once per parameter set, reuse every step."""
    H = gp["w1"].shape[1]
    nhid = gp["wm1"].shape[1]
    nout = gp["wm3"].shape[1]
    assert H == nhid and H >= nout, "packing assumes graph_hidden == nhid >= nout"

    bf16 = jnp.bfloat16
    wpack = jnp.concatenate([gp["w2"], gp["w3"], gp["wm1"], gp["wm2"]],
                            axis=1).astype(bf16)                  # (H, 4H) lane-dense
    w1 = gp["w1"].astype(bf16)                                    # (F, H)
    wm3_t = gp["wm3"].T.astype(bf16)                              # (nout, H) lane-dense
    wt_t = tp["wt"].T.astype(bf16)                                # (nout, 768) lane-dense

    def pad_to(v, width):
        v = v.reshape(1, -1)
        return jnp.pad(v, ((0, 0), (0, width - v.shape[1])))

    slab = jnp.concatenate([
        pad_to(gp["b1"], H), pad_to(gp["b2"], H), pad_to(gp["b3"], H),
        pad_to(gp["bm1"], H), pad_to(gp["bm2"], H),
        pad_to(gp["bm3"], H), pad_to(gp["ln_g"], H), pad_to(gp["ln_b"], H),
        pad_to(tp["bt"], H), pad_to(tp["ln_g"], H), pad_to(tp["ln_b"], H),
    ], axis=0).astype(jnp.float32)                                # (11, H)

    temps = jnp.concatenate(
        [gp["temp"].reshape(1), tp["temp"].reshape(1)]).astype(jnp.float32)  # (2,)

    return dict(w1=w1, wpack=wpack, wm3_t=wm3_t, wt_t=wt_t, slab=slab, temps=temps)


@jax.jit
def model_forward(packed, a_norm, x_nodes, pool, cls_hidden):
    """Fused graph-encoder + text-encoder forward in one pallas_call."""
    bf16 = jnp.bfloat16
    a = a_norm.astype(bf16)
    x = x_nodes.astype(bf16)
    p = pool.astype(bf16)
    cls = cls_hidden.astype(bf16)

    H = packed["wpack"].shape[0]
    nout = packed["wm3_t"].shape[0]
    N, F = x.shape
    Bg = p.shape[0]
    Bt, D = cls.shape

    flops = 2 * (N * N * F + N * F * H                  # layer 1
                 + N * H * H + N * N * H                # layer 2
                 + N * H * H + Bg * N * N + Bg * N * H  # layer 3 + pool fold
                 + 2 * Bg * H * H + Bg * H * nout       # MLP head
                 + Bt * D * nout)                       # text linear
    bytes_accessed = (2 * (N * N + N * F + Bg * N + F * H + 4 * H * H
                           + nout * H + nout * D + Bt * D)
                      + 4 * (11 * H + 2 + (Bg + Bt) * nout))

    vmem = pl.BlockSpec(memory_space=pltpu.MemorySpace.VMEM)
    smem = pl.BlockSpec(memory_space=pltpu.MemorySpace.SMEM)
    anyspace = pl.BlockSpec(memory_space=pl.ANY)

    out = pl.pallas_call(
        fused_encoder_kernel,
        out_shape=jax.ShapeDtypeStruct((Bg + Bt, nout), jnp.float32),
        in_specs=[vmem, vmem, vmem, vmem, vmem, vmem, vmem, smem,
                  anyspace, anyspace],
        out_specs=vmem,
        scratch_shapes=[
            pltpu.VMEM((nout, D), bf16),        # wt^T landing buffer
            pltpu.VMEM((Bt, D), bf16),          # CLS landing buffer
            pltpu.SemaphoreType.DMA((2,)),
        ],
        cost_estimate=pl.CostEstimate(
            flops=int(flops),
            transcendentals=int(2 + 2 * (Bg + Bt)),
            bytes_accessed=int(bytes_accessed)),
    )(a, x, p, packed["w1"], packed["wpack"], packed["wm3_t"],
      packed["slab"], packed["temps"], packed["wt_t"], cls)

    return out[:Bg], out[Bg:]


# ----------------------------- glue -----------------------------

def build_gcn_adjacency(edge_index, num_nodes):
    """Dense D^-1/2 (A + I_remaining) D^-1/2 like PyG gcn_norm."""
    src, dst = edge_index
    a = jnp.zeros((num_nodes, num_nodes), jnp.float32).at[dst, src].add(1.0)
    has_self = jnp.diagonal(a) > 0
    a = a + jnp.diag(jnp.where(has_self, 0.0, 1.0))
    deg = jnp.sum(a, axis=1)
    dinv = jnp.where(deg > 0, 1.0 / jnp.sqrt(deg), 0.0)
    return a * dinv[:, None] * dinv[None, :]


def build_mean_pool_matrix(batch, num_graphs):
    """P[g, n] = 1/|graph g| if node n in graph g (global_mean_pool). Rows of
    non-empty graphs sum to 1 (required for the b3 fold inside the kernel)."""
    onehot = (batch[None, :] == jnp.arange(num_graphs)[:, None]).astype(jnp.float32)
    counts = jnp.maximum(jnp.sum(onehot, axis=1, keepdims=True), 1.0)
    return onehot / counts


def synthetic_bert_last_hidden_state(input_ids, attention_mask, tok_emb, pos_emb):
    # TODO(synk): pretrained HF BERT replaced by a deterministic synthetic
    # embedding stack (token + position embeddings); only the CLS position is
    # consumed downstream.
    del attention_mask
    seq = input_ids.shape[1]
    return tok_emb[input_ids] + pos_emb[None, :seq, :]


# ----------------------------- main -----------------------------

if __name__ == "__main__":
    key = jax.random.PRNGKey(0)
    ks = jax.random.split(key, 24)

    # model hyper-params (small)
    num_node_features = 8
    graph_hidden = 32
    nhid = 32
    nout = 16
    bert_dim = 768
    vocab = 100

    # graph batch: 2 graphs, 8 nodes each
    N, num_graphs = 16, 2
    x_nodes = jax.random.normal(ks[0], (N, num_node_features), jnp.float32)
    src = jax.random.randint(ks[1], (24,), 0, N)
    dst = jax.random.randint(ks[2], (24,), 0, N)
    edge_index = (jnp.concatenate([src, dst]), jnp.concatenate([dst, src]))
    batch_vec = jnp.concatenate([jnp.zeros(8, jnp.int32), jnp.ones(8, jnp.int32)])

    # text batch
    B, S = 2, 8
    input_ids = jax.random.randint(ks[3], (B, S), 0, vocab)
    attention_mask = jnp.ones((B, S), jnp.int32)

    def lin(k, fan_in, fan_out):
        kw, kb = jax.random.split(k)
        w = jax.random.normal(kw, (fan_in, fan_out), jnp.float32) * 0.1
        b = jax.random.normal(kb, (1, fan_out), jnp.float32) * 0.01
        return w, b

    # graph encoder params
    w1, b1 = lin(ks[4], num_node_features, graph_hidden)
    w2, b2 = lin(ks[5], graph_hidden, graph_hidden)
    w3, b3 = lin(ks[6], graph_hidden, graph_hidden)
    wm1, bm1 = lin(ks[7], graph_hidden, nhid)
    wm2, bm2 = lin(ks[8], nhid, nhid)
    wm3, bm3 = lin(ks[9], nhid, nout)
    g_params = dict(
        w1=w1, b1=b1, w2=w2, b2=b2, w3=w3, b3=b3,
        wm1=wm1, bm1=bm1, wm2=wm2, bm2=bm2, wm3=wm3, bm3=bm3,
        ln_g=jnp.ones((1, nout), jnp.float32),
        ln_b=jnp.zeros((1, nout), jnp.float32),
        temp=jnp.full((1, 1), 0.07, jnp.float32),
    )

    # text encoder params
    wt, bt = lin(ks[10], bert_dim, nout)
    t_params = dict(
        wt=wt, bt=bt,
        ln_g=jnp.ones((1, nout), jnp.float32),
        ln_b=jnp.zeros((1, nout), jnp.float32),
        temp=jnp.full((1, 1), 0.07, jnp.float32),
    )
    tok_emb = jax.random.normal(ks[11], (vocab, bert_dim), jnp.float32) * 0.02
    pos_emb = jax.random.normal(ks[12], (S, bert_dim), jnp.float32) * 0.02

    # hoisted, per-parameter-set packing (done once)
    packed = pack_params(g_params, t_params)

    # batch-dependent glue
    a_norm = build_gcn_adjacency(edge_index, N)
    pool = build_mean_pool_matrix(batch_vec, num_graphs)
    last_hidden = synthetic_bert_last_hidden_state(
        input_ids, attention_mask, tok_emb, pos_emb)
    cls_hidden = last_hidden[:, 0, :]                                  # (B, 768)

    graph_encoded, text_encoded = model_forward(
        packed, a_norm, x_nodes, pool, cls_hidden)

    jax.block_until_ready((graph_encoded, text_encoded))
    assert graph_encoded.shape == (num_graphs, nout)
    assert text_encoded.shape == (B, nout)
    assert jnp.all(jnp.isfinite(graph_encoded)) and jnp.all(jnp.isfinite(text_encoded))
    print("KERNEL_OK")
</pallas_src>

<mosaic_0001>
module attributes {stable_mosaic.version = 11 : i64} {
  func.func @fused_encoder_kernel(%arg0: memref<16x16xbf16, #tpu.memory_space<vmem>>, %arg1: memref<16x8xbf16, #tpu.memory_space<vmem>>, %arg2: memref<2x16xbf16, #tpu.memory_space<vmem>>, %arg3: memref<8x32xbf16, #tpu.memory_space<vmem>>, %arg4: memref<32x128xbf16, #tpu.memory_space<vmem>>, %arg5: memref<16x32xbf16, #tpu.memory_space<vmem>>, %arg6: memref<11x32xf32, #tpu.memory_space<vmem>>, %arg7: memref<2xf32, #tpu.memory_space<smem>>, %arg8: memref<16x768xbf16, #tpu.memory_space<any>>, %arg9: memref<2x768xbf16, #tpu.memory_space<any>>, %arg10: memref<4x16xf32, #tpu.memory_space<vmem>>, %arg11: memref<16x768xbf16, #tpu.memory_space<vmem>>, %arg12: memref<2x768xbf16, #tpu.memory_space<vmem>>, %arg13: memref<2x!tpu.dma_semaphore, #tpu.memory_space<semaphore_mem>>) attributes {dimension_semantics = [], scalar_prefetch = 0 : i64, scratch_operands = 3 : i64, tpu.core_type = #tpu.core_type<tc>} {
    %c0_i32 = arith.constant 0 : i32
    %0 = tpu.memref_slice %arg13[%c0_i32] : memref<2x!tpu.dma_semaphore, #tpu.memory_space<semaphore_mem>> -> memref<1x!tpu.dma_semaphore, #tpu.memory_space<semaphore_mem>>
    %1 = tpu.memref_squeeze %0 : memref<1x!tpu.dma_semaphore, #tpu.memory_space<semaphore_mem>> -> memref<!tpu.dma_semaphore, #tpu.memory_space<semaphore_mem>>
    tpu.enqueue_dma source(%arg8 : memref<16x768xbf16, #tpu.memory_space<any>>) target(%arg11 : memref<16x768xbf16, #tpu.memory_space<vmem>>) target_semaphore(%1 : memref<!tpu.dma_semaphore, #tpu.memory_space<semaphore_mem>>)
    %c1_i32 = arith.constant 1 : i32
    %2 = tpu.memref_slice %arg13[%c1_i32] : memref<2x!tpu.dma_semaphore, #tpu.memory_space<semaphore_mem>> -> memref<1x!tpu.dma_semaphore, #tpu.memory_space<semaphore_mem>>
    %3 = tpu.memref_squeeze %2 : memref<1x!tpu.dma_semaphore, #tpu.memory_space<semaphore_mem>> -> memref<!tpu.dma_semaphore, #tpu.memory_space<semaphore_mem>>
    tpu.enqueue_dma source(%arg9 : memref<2x768xbf16, #tpu.memory_space<any>>) target(%arg12 : memref<2x768xbf16, #tpu.memory_space<vmem>>) target_semaphore(%3 : memref<!tpu.dma_semaphore, #tpu.memory_space<semaphore_mem>>)
    %c0 = arith.constant 0 : index
    %4 = memref.load %arg7[%c0] : memref<2xf32, #tpu.memory_space<smem>>
    %c1 = arith.constant 1 : index
    %5 = memref.load %arg7[%c1] : memref<2xf32, #tpu.memory_space<smem>>
    %c0_0 = arith.constant 0 : index
    %c0_1 = arith.constant 0 : index
    %6 = vector.load %arg6[%c0_0, %c0_1] : memref<11x32xf32, #tpu.memory_space<vmem>>, vector<11x32xf32>
    %7 = vector.extract_strided_slice %6 {offsets = [0, 0], sizes = [1, 32], strides = [1, 1]} : vector<11x32xf32> to vector<1x32xf32>
    %8 = vector.extract_strided_slice %6 {offsets = [1, 0], sizes = [1, 32], strides = [1, 1]} : vector<11x32xf32> to vector<1x32xf32>
    %9 = vector.extract_strided_slice %6 {offsets = [2, 0], sizes = [1, 32], strides = [1, 1]} : vector<11x32xf32> to vector<1x32xf32>
    %10 = vector.extract_strided_slice %6 {offsets = [3, 0], sizes = [1, 32], strides = [1, 1]} : vector<11x32xf32> to vector<1x32xf32>
    %11 = vector.extract_strided_slice %6 {offsets = [4, 0], sizes = [1, 32], strides = [1, 1]} : vector<11x32xf32> to vector<1x32xf32>
    %12 = vector.extract_strided_slice %6 {offsets = [5, 0], sizes = [1, 16], strides = [1, 1]} : vector<11x32xf32> to vector<1x16xf32>
    %13 = vector.extract_strided_slice %6 {offsets = [6, 0], sizes = [1, 16], strides = [1, 1]} : vector<11x32xf32> to vector<1x16xf32>
    %14 = vector.extract_strided_slice %6 {offsets = [7, 0], sizes = [1, 16], strides = [1, 1]} : vector<11x32xf32> to vector<1x16xf32>
    %15 = vector.extract_strided_slice %6 {offsets = [8, 0], sizes = [1, 16], strides = [1, 1]} : vector<11x32xf32> to vector<1x16xf32>
    %16 = vector.extract_strided_slice %6 {offsets = [9, 0], sizes = [1, 16], strides = [1, 1]} : vector<11x32xf32> to vector<1x16xf32>
    %17 = vector.extract_strided_slice %6 {offsets = [10, 0], sizes = [1, 16], strides = [1, 1]} : vector<11x32xf32> to vector<1x16xf32>
    %c0_2 = arith.constant 0 : index
    %c0_3 = arith.constant 0 : index
    %18 = vector.load %arg0[%c0_2, %c0_3] : memref<16x16xbf16, #tpu.memory_space<vmem>>, vector<16x16xbf16>
    %c0_4 = arith.constant 0 : index
    %c0_5 = arith.constant 0 : index
    %19 = vector.load %arg1[%c0_4, %c0_5] : memref<16x8xbf16, #tpu.memory_space<vmem>>, vector<16x8xbf16>
    %cst = arith.constant dense<0.000000e+00> : vector<16x8xf32>
    %20 = tpu.matmul %18, %19, %cst {dimension_numbers = #tpu.dot_dimension_numbers<[1], [0], [0], [1], [0, 0, 1, 1], [], []>} : vector<16x16xbf16>, vector<16x8xbf16>, vector<16x8xf32> -> vector<16x8xf32>
    %21 = arith.truncf %20 : vector<16x8xf32> to vector<16x8xbf16>
    %c0_6 = arith.constant 0 : index
    %c0_7 = arith.constant 0 : index
    %22 = vector.load %arg3[%c0_6, %c0_7] : memref<8x32xbf16, #tpu.memory_space<vmem>>, vector<8x32xbf16>
    %cst_8 = arith.constant dense<0.000000e+00> : vector<16x32xf32>
    %23 = tpu.matmul %21, %22, %cst_8 {dimension_numbers = #tpu.dot_dimension_numbers<[1], [0], [0], [1], [0, 0, 1, 1], [], []>} : vector<16x8xbf16>, vector<8x32xbf16>, vector<16x32xf32> -> vector<16x32xf32>
    %24 = vector.broadcast %7 : vector<1x32xf32> to vector<16x32xf32>
    %25 = arith.addf %23, %24 : vector<16x32xf32>
    %cst_9 = arith.constant 0.000000e+00 : f32
    %26 = vector.broadcast %cst_9 : f32 to vector<16x32xf32>
    %27 = arith.maximumf %25, %26 : vector<16x32xf32>
    %28 = arith.truncf %27 : vector<16x32xf32> to vector<16x32xbf16>
    %c0_10 = arith.constant 0 : index
    %c0_11 = arith.constant 0 : index
    %29 = vector.load %arg4[%c0_10, %c0_11] : memref<32x128xbf16, #tpu.memory_space<vmem>>, vector<32x32xbf16>
    %cst_12 = arith.constant dense<0.000000e+00> : vector<16x32xf32>
    %30 = tpu.matmul %28, %29, %cst_12 {dimension_numbers = #tpu.dot_dimension_numbers<[1], [0], [0], [1], [0, 0, 1, 1], [], []>} : vector<16x32xbf16>, vector<32x32xbf16>, vector<16x32xf32> -> vector<16x32xf32>
    %31 = arith.truncf %30 : vector<16x32xf32> to vector<16x32xbf16>
    %cst_13 = arith.constant dense<0.000000e+00> : vector<16x32xf32>
    %32 = tpu.matmul %18, %31, %cst_13 {dimension_numbers = #tpu.dot_dimension_numbers<[1], [0], [0], [1], [0, 0, 1, 1], [], []>} : vector<16x16xbf16>, vector<16x32xbf16>, vector<16x32xf32> -> vector<16x32xf32>
    %33 = vector.broadcast %8 : vector<1x32xf32> to vector<16x32xf32>
    %34 = arith.addf %32, %33 : vector<16x32xf32>
    %cst_14 = arith.constant 0.000000e+00 : f32
    %35 = vector.broadcast %cst_14 : f32 to vector<16x32xf32>
    %36 = arith.maximumf %34, %35 : vector<16x32xf32>
    %c0_15 = arith.constant 0 : index
    %c0_16 = arith.constant 0 : index
    %37 = vector.load %arg2[%c0_15, %c0_16] : memref<2x16xbf16, #tpu.memory_space<vmem>>, vector<2x16xbf16>
    %cst_17 = arith.constant dense<0.000000e+00> : vector<2x16xf32>
    %38 = tpu.matmul %37, %18, %cst_17 {dimension_numbers = #tpu.dot_dimension_numbers<[1], [0], [0], [1], [0, 0, 1, 1], [], []>} : vector<2x16xbf16>, vector<16x16xbf16>, vector<2x16xf32> -> vector<2x16xf32>
    %39 = arith.truncf %36 : vector<16x32xf32> to vector<16x32xbf16>
    %c0_18 = arith.constant 0 : index
    %c32 = arith.constant 32 : index
    %40 = vector.load %arg4[%c0_18, %c32] : memref<32x128xbf16, #tpu.memory_space<vmem>>, vector<32x32xbf16>
    %cst_19 = arith.constant dense<0.000000e+00> : vector<16x32xf32>
    %41 = tpu.matmul %39, %40, %cst_19 {dimension_numbers = #tpu.dot_dimension_numbers<[1], [0], [0], [1], [0, 0, 1, 1], [], []>} : vector<16x32xbf16>, vector<32x32xbf16>, vector<16x32xf32> -> vector<16x32xf32>
    %42 = arith.truncf %38 : vector<2x16xf32> to vector<2x16xbf16>
    %43 = arith.truncf %41 : vector<16x32xf32> to vector<16x32xbf16>
    %cst_20 = arith.constant dense<0.000000e+00> : vector<2x32xf32>
    %44 = tpu.matmul %42, %43, %cst_20 {dimension_numbers = #tpu.dot_dimension_numbers<[1], [0], [0], [1], [0, 0, 1, 1], [], []>} : vector<2x16xbf16>, vector<16x32xbf16>, vector<2x32xf32> -> vector<2x32xf32>
    %45 = vector.broadcast %9 : vector<1x32xf32> to vector<2x32xf32>
    %46 = arith.addf %44, %45 : vector<2x32xf32>
    %47 = arith.truncf %46 : vector<2x32xf32> to vector<2x32xbf16>
    %c0_21 = arith.constant 0 : index
    %c64 = arith.constant 64 : index
    %48 = vector.load %arg4[%c0_21, %c64] : memref<32x128xbf16, #tpu.memory_space<vmem>>, vector<32x32xbf16>
    %cst_22 = arith.constant dense<0.000000e+00> : vector<2x32xf32>
    %49 = tpu.matmul %47, %48, %cst_22 {dimension_numbers = #tpu.dot_dimension_numbers<[1], [0], [0], [1], [0, 0, 1, 1], [], []>} : vector<2x32xbf16>, vector<32x32xbf16>, vector<2x32xf32> -> vector<2x32xf32>
    %50 = vector.broadcast %10 : vector<1x32xf32> to vector<2x32xf32>
    %51 = arith.addf %49, %50 : vector<2x32xf32>
    %cst_23 = arith.constant 0.000000e+00 : f32
    %52 = vector.broadcast %cst_23 : f32 to vector<2x32xf32>
    %53 = arith.maximumf %51, %52 : vector<2x32xf32>
    %54 = arith.truncf %53 : vector<2x32xf32> to vector<2x32xbf16>
    %c0_24 = arith.constant 0 : index
    %c96 = arith.constant 96 : index
    %55 = vector.load %arg4[%c0_24, %c96] : memref<32x128xbf16, #tpu.memory_space<vmem>>, vector<32x32xbf16>
    %cst_25 = arith.constant dense<0.000000e+00> : vector<2x32xf32>
    %56 = tpu.matmul %54, %55, %cst_25 {dimension_numbers = #tpu.dot_dimension_numbers<[1], [0], [0], [1], [0, 0, 1, 1], [], []>} : vector<2x32xbf16>, vector<32x32xbf16>, vector<2x32xf32> -> vector<2x32xf32>
    %57 = vector.broadcast %11 : vector<1x32xf32> to vector<2x32xf32>
    %58 = arith.addf %56, %57 : vector<2x32xf32>
    %cst_26 = arith.constant 0.000000e+00 : f32
    %59 = vector.broadcast %cst_26 : f32 to vector<2x32xf32>
    %60 = arith.maximumf %58, %59 : vector<2x32xf32>
    %61 = arith.truncf %60 : vector<2x32xf32> to vector<2x32xbf16>
    %c0_27 = arith.constant 0 : index
    %c0_28 = arith.constant 0 : index
    %62 = vector.load %arg5[%c0_27, %c0_28] : memref<16x32xbf16, #tpu.memory_space<vmem>>, vector<16x32xbf16>
    %cst_29 = arith.constant dense<0.000000e+00> : vector<2x16xf32>
    %63 = tpu.matmul %61, %62, %cst_29 {dimension_numbers = #tpu.dot_dimension_numbers<[1], [1], [0], [0], [0, 0, 1, 0], [], []>} : vector<2x32xbf16>, vector<16x32xbf16>, vector<2x16xf32> -> vector<2x16xf32>
    %64 = vector.broadcast %12 : vector<1x16xf32> to vector<2x16xf32>
    %65 = arith.addf %63, %64 : vector<2x16xf32>
    %cst_30 = arith.constant dense<0.000000e+00> : vector<2xf32>
    %66 = vector.multi_reduction <add>, %65, %cst_30 [1] : vector<2x16xf32> to vector<2xf32>
    %67 = vector.shape_cast %66 : vector<2xf32> to vector<2x1xf32>
    %cst_31 = arith.constant 1.600000e+01 : f32
    %68 = vector.broadcast %cst_31 : f32 to vector<2x1xf32>
    %69 = arith.divf %67, %68 : vector<2x1xf32>
    %70 = vector.broadcast %69 : vector<2x1xf32> to vector<2x16xf32>
    %71 = arith.subf %65, %70 : vector<2x16xf32>
    %72 = arith.mulf %71, %71 : vector<2x16xf32>
    %cst_32 = arith.constant dense<0.000000e+00> : vector<2xf32>
    %73 = vector.multi_reduction <add>, %72, %cst_32 [1] : vector<2x16xf32> to vector<2xf32>
    %74 = vector.shape_cast %73 : vector<2xf32> to vector<2x1xf32>
    %cst_33 = arith.constant 1.600000e+01 : f32
    %75 = vector.broadcast %cst_33 : f32 to vector<2x1xf32>
    %76 = arith.divf %74, %75 : vector<2x1xf32>
    %77 = vector.broadcast %69 : vector<2x1xf32> to vector<2x16xf32>
    %78 = arith.subf %65, %77 : vector<2x16xf32>
    %cst_34 = arith.constant 9.99999974E-6 : f32
    %79 = vector.broadcast %cst_34 : f32 to vector<2x1xf32>
    %80 = arith.addf %76, %79 : vector<2x1xf32>
    %81 = math.rsqrt %80 : vector<2x1xf32>
    %82 = vector.broadcast %81 : vector<2x1xf32> to vector<2x16xf32>
    %83 = arith.mulf %78, %82 : vector<2x16xf32>
    %84 = vector.broadcast %13 : vector<1x16xf32> to vector<2x16xf32>
    %85 = arith.mulf %83, %84 : vector<2x16xf32>
    %86 = vector.broadcast %14 : vector<1x16xf32> to vector<2x16xf32>
    %87 = arith.addf %85, %86 : vector<2x16xf32>
    %88 = math.exp %4 : f32
    %89 = vector.broadcast %88 : f32 to vector<2x16xf32>
    %90 = arith.mulf %87, %89 : vector<2x16xf32>
    %c0_i32_35 = arith.constant 0 : i32
    %91 = tpu.memref_slice %arg13[%c0_i32_35] : memref<2x!tpu.dma_semaphore, #tpu.memory_space<semaphore_mem>> -> memref<1x!tpu.dma_semaphore, #tpu.memory_space<semaphore_mem>>
    %92 = tpu.memref_squeeze %91 : memref<1x!tpu.dma_semaphore, #tpu.memory_space<semaphore_mem>> -> memref<!tpu.dma_semaphore, #tpu.memory_space<semaphore_mem>>
    tpu.wait_dma2 semaphore(%92 : memref<!tpu.dma_semaphore, #tpu.memory_space<semaphore_mem>>) src(%arg8 : memref<16x768xbf16, #tpu.memory_space<any>>) dst(%arg11 : memref<16x768xbf16, #tpu.memory_space<vmem>>)
    %c1_i32_36 = arith.constant 1 : i32
    %93 = tpu.memref_slice %arg13[%c1_i32_36] : memref<2x!tpu.dma_semaphore, #tpu.memory_space<semaphore_mem>> -> memref<1x!tpu.dma_semaphore, #tpu.memory_space<semaphore_mem>>
    %94 = tpu.memref_squeeze %93 : memref<1x!tpu.dma_semaphore, #tpu.memory_space<semaphore_mem>> -> memref<!tpu.dma_semaphore, #tpu.memory_space<semaphore_mem>>
    tpu.wait_dma2 semaphore(%94 : memref<!tpu.dma_semaphore, #tpu.memory_space<semaphore_mem>>) src(%arg9 : memref<2x768xbf16, #tpu.memory_space<any>>) dst(%arg12 : memref<2x768xbf16, #tpu.memory_space<vmem>>)
    %c0_37 = arith.constant 0 : index
    %c0_38 = arith.constant 0 : index
    %95 = vector.load %arg12[%c0_37, %c0_38] : memref<2x768xbf16, #tpu.memory_space<vmem>>, vector<2x768xbf16>
    %c0_39 = arith.constant 0 : index
    %c0_40 = arith.constant 0 : index
    %96 = vector.load %arg11[%c0_39, %c0_40] : memref<16x768xbf16, #tpu.memory_space<vmem>>, vector<16x768xbf16>
    %cst_41 = arith.constant dense<0.000000e+00> : vector<2x16xf32>
    %97 = tpu.matmul %95, %96, %cst_41 {dimension_numbers = #tpu.dot_dimension_numbers<[1], [1], [0], [0], [0, 0, 1, 0], [], []>} : vector<2x768xbf16>, vector<16x768xbf16>, vector<2x16xf32> -> vector<2x16xf32>
    %98 = vector.broadcast %15 : vector<1x16xf32> to vector<2x16xf32>
    %99 = arith.addf %97, %98 : vector<2x16xf32>
    %cst_42 = arith.constant dense<0.000000e+00> : vector<2xf32>
    %100 = vector.multi_reduction <add>, %99, %cst_42 [1] : vector<2x16xf32> to vector<2xf32>
    %101 = vector.shape_cast %100 : vector<2xf32> to vector<2x1xf32>
    %cst_43 = arith.constant 1.600000e+01 : f32
    %102 = vector.broadcast %cst_43 : f32 to vector<2x1xf32>
    %103 = arith.divf %101, %102 : vector<2x1xf32>
    %104 = vector.broadcast %103 : vector<2x1xf32> to vector<2x16xf32>
    %105 = arith.subf %99, %104 : vector<2x16xf32>
    %106 = arith.mulf %105, %105 : vector<2x16xf32>
    %cst_44 = arith.constant dense<0.000000e+00> : vector<2xf32>
    %107 = vector.multi_reduction <add>, %106, %cst_44 [1] : vector<2x16xf32> to vector<2xf32>
    %108 = vector.shape_cast %107 : vector<2xf32> to vector<2x1xf32>
    %cst_45 = arith.constant 1.600000e+01 : f32
    %109 = vector.broadcast %cst_45 : f32 to vector<2x1xf32>
    %110 = arith.divf %108, %109 : vector<2x1xf32>
    %111 = vector.broadcast %103 : vector<2x1xf32> to vector<2x16xf32>
    %112 = arith.subf %99, %111 : vector<2x16xf32>
    %cst_46 = arith.constant 9.99999974E-6 : f32
    %113 = vector.broadcast %cst_46 : f32 to vector<2x1xf32>
    %114 = arith.addf %110, %113 : vector<2x1xf32>
    %115 = math.rsqrt %114 : vector<2x1xf32>
    %116 = vector.broadcast %115 : vector<2x1xf32> to vector<2x16xf32>
    %117 = arith.mulf %112, %116 : vector<2x16xf32>
    %118 = vector.broadcast %16 : vector<1x16xf32> to vector<2x16xf32>
    %119 = arith.mulf %117, %118 : vector<2x16xf32>
    %120 = vector.broadcast %17 : vector<1x16xf32> to vector<2x16xf32>
    %121 = arith.addf %119, %120 : vector<2x16xf32>
    %122 = math.exp %5 : f32
    %123 = vector.broadcast %122 : f32 to vector<2x16xf32>
    %124 = arith.mulf %121, %123 : vector<2x16xf32>
    %125 = tpu.concatenate %90, %124 in 0 : vector<2x16xf32>, vector<2x16xf32> -> vector<4x16xf32>
    %c0_47 = arith.constant 0 : index
    %c0_48 = arith.constant 0 : index
    %126 = vector.load %arg10[%c0_47, %c0_48] : memref<4x16xf32, #tpu.memory_space<vmem>>, vector<4x16xf32>
    tpu.vector_store %arg10[%c0_47, %c0_48], %125 {strides = array<i32>} : memref<4x16xf32, #tpu.memory_space<vmem>>, vector<4x16xf32>,
    return
  }
}

</mosaic_0001>

<llo_original>
// kernel: model_forward.1
$region0: #{model_forward.1}
  #allocation0 [shape = 'u32[]', space=smem, size = 0x4, offset = 0x4, fixed_abs, tag = 'smem constant byte address 0x4 - core index']
  #allocation1 [shape = 'u32[144,128]{1,0:T(1,128)}', space=vmem, size = 0x12000, scoped, tag = 'internal scratch']
  #allocation2 [shape = 'bf16[16,768]{1,0:T(8,128)(2,1)}', space=vmem, size = 0x6000, scoped, tag = 'scratch operand']
  #allocation3 [shape = 'bf16[2,768]{1,0:T(2,128)(2,1)}', space=vmem, size = 0xc00, scoped, tag = 'scratch operand']
  #allocation4 [shape = 's32[2]{0}', space=sflag, size = 0x8, scoped, tag = 'scratch operand']
  #allocation14 [shape = 's32[]', space=sflag, size = 0x4, offset = 0, fixed_abs, tag = 'sflag constant byte address 0x0 - dummy sync flag']
  #allocation15 [shape = 's32[]', space=sflag, size = 0x4, offset = 0, fixed_abs, tag = 'sflag constant byte address 0x0 - dummy sync flag']
  %s0 = inlined_call_operand.vmem [shape: bf16[16,16], index: 0, kind: input, shape index: {}]
  %s1 = inlined_call_operand.vmem [shape: bf16[16,8], index: 1, kind: input, shape index: {}]
  %s2 = inlined_call_operand.vmem [shape: bf16[2,16], index: 2, kind: input, shape index: {}]
  %s3 = inlined_call_operand.hbm [shape: bf16[8,32], index: 3, kind: input, shape index: {}]
  %s4 = inlined_call_operand.hbm [shape: bf16[32,128], index: 4, kind: input, shape index: {}]
  %s5 = inlined_call_operand.hbm [shape: bf16[16,32], index: 5, kind: input, shape index: {}]
  %s6 = inlined_call_operand.hbm [shape: f32[11,32], index: 6, kind: input, shape index: {}]
  %s7 = inlined_call_operand.vmem [shape: f32[2], index: 7, kind: input, shape index: {}]
  %s8 = inlined_call_operand.vmem [shape: bf16[16,768], index: 8, kind: input, shape index: {}]
  %s9 = inlined_call_operand.vmem [shape: bf16[2,768], index: 9, kind: input, shape index: {}]
  %s10 = inlined_call_operand.vmem [shape: f32[4,16], index: 10, kind: output, shape index: {}]
  %s11 = sld [smem:[#allocation0]]
  $region126: #{model_forward.1} parent=0
    _
  %s13 = ssub.s32 1, %s11
  %s14 = scalar_select 0, %s13, %s11
  $region1: #{model_forward.1} parent=0
    #allocation5 [shape = 'u8[2048]{0}', space=vmem, size = 0x800, scoped, tag = 'input window, operand 3, single buffered']
    #allocation6 [shape = 's32[1]{0}', space=sflag, size = 0x4, scoped, tag = 'scoped memory for model_forward.1']
    #allocation7 [shape = 's32[1]{0}', space=sflag, size = 0x4, scoped, tag = 'scoped memory for model_forward.1']
    #allocation8 [shape = 'u8[8192]{0}', space=vmem, size = 0x2000, scoped, tag = 'input window, operand 4, single buffered']
    #allocation9 [shape = 's32[1]{0}', space=sflag, size = 0x4, scoped, tag = 'scoped memory for model_forward.1']
    #allocation10 [shape = 'u8[4096]{0}', space=vmem, size = 0x1000, scoped, tag = 'input window, operand 5, single buffered']
    #allocation11 [shape = 'u8[8192]{0}', space=vmem, size = 0x2000, scoped, tag = 'input window, operand 6, single buffered']
    #allocation12 [shape = 's32[1]{0}', space=sflag, size = 0x4, scoped, tag = 'scoped memory for model_forward.1']
    #allocation13 [shape = 'u8[512]{0}', space=smem, size = 0x200, scoped, tag = 'input window, operand 7, single buffered']
    %15 = vsyncpa [#allocation6], 0
    %16 = vsyncpa [#allocation9], 0
    %17 = vsyncpa [#allocation12], 0
    %18 = vsyncpa [#allocation7], 0
    // Predicated region
    $region2: #{model_forward.1} parent=1 // pred_check
      _
    $region3: #{model_forward.1} parent=1 // pred_check_branch
      %20 = sbr.rel (0) target = $region5
    $region4: #{model_forward.1} parent=1 // pred_region
      _
    $region5: #{model_forward.1} parent=1 // pred_fallthru
      _
    // Predicated region
    $region6: #{model_forward.1} parent=1 // pred_check
      _
    $region7: #{model_forward.1} parent=1 // pred_check_branch
      %22 = sbr.rel (0) target = $region9
    $region8: #{model_forward.1} parent=1 // pred_region
      _
    $region9: #{model_forward.1} parent=1 // pred_fallthru
      _
    // Predicated region
    $region10: #{model_forward.1} parent=1 // pred_check
      _
    $region11: #{model_forward.1} parent=1 // pred_check_branch
      %24 = sbr.rel (0) target = $region13
    $region12: #{model_forward.1} parent=1 // pred_region
      _
    $region13: #{model_forward.1} parent=1 // pred_fallthru
      _
    // Predicated region
    $region14: #{model_forward.1} parent=1 // pred_check
      _
    $region15: #{model_forward.1} parent=1 // pred_check_branch
      %26 = sbr.rel (0) target = $region17
    $region16: #{model_forward.1} parent=1 // pred_region
      %s28 = ssub.s32 64, 64
      %29 = vsyncadd [#allocation6], %s28
      %s31 = sshll.u32 [#allocation5], 4
      %s32 = int_to_ptr.vmem [resolvable:$true] %s31
      %34 = dma.hbm_to_vmem [thread:$0]  %s3, 64, %s32, [#allocation6]
    $region17: #{model_forward.1} parent=1 // pred_fallthru
      _
    // Predicated region
    $region18: #{model_forward.1} parent=1 // pred_check
      _
    $region19: #{model_forward.1} parent=1 // pred_check_branch
      %36 = sbr.rel (0) target = $region21
    $region20: #{model_forward.1} parent=1 // pred_region
      %s38 = ssub.s32 256, 256
      %39 = vsyncadd [#allocation9], %s38
      %s40 = sshll.u32 [#allocation8], 4
      %s41 = int_to_ptr.vmem [resolvable:$true] %s40
      %46 = dma.hbm_to_vmem [thread:$0]  %s4, 256, %s41, [#allocation9], 64, 64, 4
    $region21: #{model_forward.1} parent=1 // pred_fallthru
      _
    // Predicated region
    $region22: #{model_forward.1} parent=1 // pred_check
      _
    $region23: #{model_forward.1} parent=1 // pred_check_branch
      %48 = sbr.rel (0) target = $region25
    $region24: #{model_forward.1} parent=1 // pred_region
      %s50 = ssub.s32 128, 128
      %51 = vsyncadd [#allocation9], %s50
      %s52 = sshll.u32 [#allocation10], 4
      %s53 = int_to_ptr.vmem [resolvable:$true] %s52
      %58 = dma.hbm_to_vmem [thread:$0]  %s5, 128, %s53, [#allocation9], 64, 64, 4
    $region25: #{model_forward.1} parent=1 // pred_fallthru
      _
    // Predicated region
    $region26: #{model_forward.1} parent=1 // pred_check
      _
    $region27: #{model_forward.1} parent=1 // pred_check_branch
      %60 = sbr.rel (0) target = $region29
    $region28: #{model_forward.1} parent=1 // pred_region
      %s62 = ssub.s32 256, 256
      %63 = vsyncadd [#allocation12], %s62
      %s64 = sshll.u32 [#allocation11], 4
      %s65 = int_to_ptr.vmem [resolvable:$true] %s64
      %70 = dma.hbm_to_vmem [thread:$0]  %s6, 256, %s65, [#allocation12], 128, 128, 8
    $region29: #{model_forward.1} parent=1 // pred_fallthru
      _
    // Predicated region
    $region30: #{model_forward.1} parent=1 // pred_check
      _
    $region31: #{model_forward.1} parent=1 // pred_check_branch
      %72 = sbr.rel (0) target = $region33
    $region32: #{model_forward.1} parent=1 // pred_region
      %s74 = ssub.s32 16, 16
      %75 = vsyncadd [#allocation7], %s74
      %s77 = sshll.u32 %s7, 4
      %s78 = int_to_ptr.vmem [resolvable:$true] %s77
      %80 = dma.vmem_to_smem %s78, 16, [#allocation13], [#allocation7]
    $region33: #{model_forward.1} parent=1 // pred_fallthru
      _
    // Predicated region
    $region34: #{model_forward.1} parent=1 // pred_check
      _
    $region35: #{model_forward.1} parent=1 // pred_check_branch
      %82 = sbr.rel (0) target = $region37
    $region36: #{model_forward.1} parent=1 // pred_region
      %83 = dma.done [#allocation6], 64
    $region37: #{model_forward.1} parent=1 // pred_fallthru
      _
    // Predicated region
    $region38: #{model_forward.1} parent=1 // pred_check
      _
    $region39: #{model_forward.1} parent=1 // pred_check_branch
      %85 = sbr.rel (0) target = $region41
    $region40: #{model_forward.1} parent=1 // pred_region
      %86 = dma.done [#allocation9], 256
    $region41: #{model_forward.1} parent=1 // pred_fallthru
      _
    // Predicated region
    $region42: #{model_forward.1} parent=1 // pred_check
      _
    $region43: #{model_forward.1} parent=1 // pred_check_branch
      %88 = sbr.rel (0) target = $region45
    $region44: #{model_forward.1} parent=1 // pred_region
      %89 = dma.done [#allocation9], 128
    $region45: #{model_forward.1} parent=1 // pred_fallthru
      _
    // Predicated region
    $region46: #{model_forward.1} parent=1 // pred_check
      _
    $region47: #{model_forward.1} parent=1 // pred_check_branch
      %91 = sbr.rel (0) target = $region49
    $region48: #{model_forward.1} parent=1 // pred_region
      %92 = dma.done [#allocation12], 256
    $region49: #{model_forward.1} parent=1 // pred_fallthru
      _
    // Predicated region
    $region50: #{model_forward.1} parent=1 // pred_check
      _
    $region51: #{model_forward.1} parent=1 // pred_check_branch
      %94 = sbr.rel (0) target = $region53
    $region52: #{model_forward.1} parent=1 // pred_region
      %95 = dma.done [#allocation7], 16
    $region53: #{model_forward.1} parent=1 // pred_fallthru
      _
    %96 = sfence
    %p99 = scmp.lt.u32.totalorder 48, 8
    %p100 = pneg %p99
    // Predicated region
    $region54: #{model_forward.1} parent=1 // pred_check
      _
    $region55: #{model_forward.1} parent=1 // pred_check_branch
      %102 = sbr.rel (%p99) target = $region57
    $region56: #{model_forward.1} parent=1 // pred_region
      %s118 = sand.u32 48, 7
      %p119 = scmp.eq.s32.totalorder %s118, 0
      // Predicated region
      $region69: #{model_forward.1} parent=56 // pred_check
        %p120 = pneg %p119
      $region70: #{model_forward.1} parent=56 // pred_check_branch
        %122 = sbr.rel (%p120) target = $region72
      $region71: #{model_forward.1} parent=56 // pred_region
        loop: start=0, step=1, limit=1
        $region73: #{model_forward.1} parent=71 // loop_pre_header
          _
        $region74: #{model_forward.1} parent=71 // loop_header
          %s124 = sphi 0, %s128
          %p125 = scmp.ge.s32.totalorder %s124, 1
          %s129 = sphi %s8, %s8
          %s130 = sphi [#allocation2], [#allocation2]
        $region75: #{model_forward.1} parent=71 // loop_header_branch
          %127 = sbr.rel (%p125) target = $region79
        $region76: #{model_forward.1} parent=71 // loop_body
          %v131 = vld [vmem:[%s129] sm:$0xff]
          %132 = vst [vmem:[%s130] sm:$0xff] %v131
          %v133 = vld [vmem:[%s129 + $0x8] sm:$0xff]
          %134 = vst [vmem:[%s130 + $0x8] sm:$0xff] %v133
          %v135 = vld [vmem:[%s129 + $0x10] sm:$0xff]
          %136 = vst [vmem:[%s130 + $0x10] sm:$0xff] %v135
          %v137 = vld [vmem:[%s129 + $0x18] sm:$0xff]
          %138 = vst [vmem:[%s130 + $0x18] sm:$0xff] %v137
          %v139 = vld [vmem:[%s129 + $0x20] sm:$0xff]
          %140 = vst [vmem:[%s130 + $0x20] sm:$0xff] %v139
          %v141 = vld [vmem:[%s129 + $0x28] sm:$0xff]
          %142 = vst [vmem:[%s130 + $0x28] sm:$0xff] %v141
        $region77: #{model_forward.1} parent=71 // loop_footer
          %s128 = sadd.s32 1, %s124
        $region78: #{model_forward.1} parent=71 // loop_footer_branch
          %123 = sbr.rel target = $region74
        $region79: #{model_forward.1} parent=71 // loop_exit
          _
      $region72: #{model_forward.1} parent=56 // pred_fallthru
        _
      %p143 = pneg %p119
      // Predicated region
      $region80: #{model_forward.1} parent=56 // pred_check
        _
      $region81: #{model_forward.1} parent=56 // pred_check_branch
        %145 = sbr.rel (%p119) target = $region83
      $region82: #{model_forward.1} parent=56 // pred_region
        %s146 = sand.u32 48, 7
      $region83: #{model_forward.1} parent=56 // pred_fallthru
        _
    $region57: #{model_forward.1} parent=1 // pred_fallthru
      _
    // Predicated region
    $region58: #{model_forward.1} parent=1 // pred_check
      %p103 = pneg %p99
    $region59: #{model_forward.1} parent=1 // pred_check_branch
      %105 = sbr.rel (%p103) target = $region61
    $region60: #{model_forward.1} parent=1 // pred_region
      %s106 = sshll.u32 1, 48
      %s107 = ssub.s32 %s106, 1
      loop: start=0, step=1, limit=1
      $region62: #{model_forward.1} parent=60 // loop_pre_header
        _
      $region63: #{model_forward.1} parent=60 // loop_header
        %s109 = sphi 0, %s113
        %p110 = scmp.ge.s32.totalorder %s109, 1
        %s114 = sphi %s8, %s8
        %s115 = sphi [#allocation2], [#allocation2]
      $region64: #{model_forward.1} parent=60 // loop_header_branch
        %112 = sbr.rel (%p110) target = $region68
      $region65: #{model_forward.1} parent=60 // loop_body
        %v116 = vld [vmem:[%s114] sm:%s107]
        %117 = vst [vmem:[%s115] sm:%s107] %v116
      $region66: #{model_forward.1} parent=60 // loop_footer
        %s113 = sadd.s32 1, %s109
      $region67: #{model_forward.1} parent=60 // loop_footer_branch
        %108 = sbr.rel target = $region63
      $region68: #{model_forward.1} parent=60 // loop_exit
        _
    $region61: #{model_forward.1} parent=1 // pred_fallthru
      _
    // Predicated region
    $region84: #{model_forward.1} parent=1 // pred_check
      _
    $region85: #{model_forward.1} parent=1 // pred_check_branch
      %149 = sbr.rel (0) target = $region87
    $region86: #{model_forward.1} parent=1 // pred_region
      %150 = vsyncadd [#allocation4], 768
    $region87: #{model_forward.1} parent=1 // pred_fallthru
      _
    %s151 = scalar_lea.sflag [#allocation4], 1
    %p153 = scmp.lt.u32.totalorder 6, 8
    %p154 = pneg %p153
    // Predicated region
    $region88: #{model_forward.1} parent=1 // pred_check
      _
    $region89: #{model_forward.1} parent=1 // pred_check_branch
      %156 = sbr.rel (%p153) target = $region91
    $region90: #{model_forward.1} parent=1 // pred_region
      %s172 = sand.u32 6, 7
      %p173 = scmp.eq.s32.totalorder %s172, 0
      %p174 = pneg %p173
      // Predicated region
      $region103: #{model_forward.1} parent=90 // pred_check
        _
      $region104: #{model_forward.1} parent=90 // pred_check_branch
        %176 = sbr.rel (%p173) target = $region106
      $region105: #{model_forward.1} parent=90 // pred_region
        %s177 = sand.u32 6, 7
        %s178 = ssub.s32 6, %s177
        %s179 = scalar_lea.vmem %s9, %s178
        %s180 = ssub.s32 6, %s177
        %s181 = scalar_lea.vmem [#allocation3], %s180
        %s182 = sshll.u32 1, %s177
        %s183 = ssub.s32 %s182, 1
        loop: start=0, step=1, limit=1
        $region107: #{model_forward.1} parent=105 // loop_pre_header
          _
        $region108: #{model_forward.1} parent=105 // loop_header
          %s185 = sphi 0, %s189
          %p186 = scmp.ge.s32.totalorder %s185, 1
          %s190 = sphi %s179, %s179
          %s191 = sphi %s181, %s181
        $region109: #{model_forward.1} parent=105 // loop_header_branch
          %188 = sbr.rel (%p186) target = $region113
        $region110: #{model_forward.1} parent=105 // loop_body
          %v192 = vld [vmem:[%s190] sm:%s183]
          %193 = vst [vmem:[%s191] sm:%s183] %v192
        $region111: #{model_forward.1} parent=105 // loop_footer
          %s189 = sadd.s32 1, %s185
        $region112: #{model_forward.1} parent=105 // loop_footer_branch
          %184 = sbr.rel target = $region108
        $region113: #{model_forward.1} parent=105 // loop_exit
          _
      $region106: #{model_forward.1} parent=90 // pred_fallthru
        _
    $region91: #{model_forward.1} parent=1 // pred_fallthru
      _
    // Predicated region
    $region92: #{model_forward.1} parent=1 // pred_check
      %p157 = pneg %p153
    $region93: #{model_forward.1} parent=1 // pred_check_branch
      %159 = sbr.rel (%p157) target = $region95
    $region94: #{model_forward.1} parent=1 // pred_region
      %s160 = sshll.u32 1, 6
      %s161 = ssub.s32 %s160, 1
      loop: start=0, step=1, limit=1
      $region96: #{model_forward.1} parent=94 // loop_pre_header
        _
      $region97: #{model_forward.1} parent=94 // loop_header
        %s163 = sphi 0, %s167
        %p164 = scmp.ge.s32.totalorder %s163, 1
        %s168 = sphi %s9, %s9
        %s169 = sphi [#allocation3], [#allocation3]
      $region98: #{model_forward.1} parent=94 // loop_header_branch
        %166 = sbr.rel (%p164) target = $region102
      $region99: #{model_forward.1} parent=94 // loop_body
        %v170 = vld [vmem:[%s168] sm:%s161]
        %171 = vst [vmem:[%s169] sm:%s161] %v170
      $region100: #{model_forward.1} parent=94 // loop_footer
        %s167 = sadd.s32 1, %s163
      $region101: #{model_forward.1} parent=94 // loop_footer_branch
        %162 = sbr.rel target = $region97
      $region102: #{model_forward.1} parent=94 // loop_exit
        _
    $region95: #{model_forward.1} parent=1 // pred_fallthru
      _
    // Predicated region
    $region114: #{model_forward.1} parent=1 // pred_check
      _
    $region115: #{model_forward.1} parent=1 // pred_check_branch
      %196 = sbr.rel (0) target = $region117
    $region116: #{model_forward.1} parent=1 // pred_region
      %197 = vsyncadd %s151, 96
    $region117: #{model_forward.1} parent=1 // pred_fallthru
      _
    %s198 = sld [smem:[#allocation13]]
    %s199 = sld [smem:[#allocation13 + $0x1]]
    %v200 = vld [vmem:[#allocation11] sm:$0xff]
    %v201 = vld [vmem:[#allocation11 + $0x8] sm:$0x7]
    %v202 = vld [vmem:[%s0] sm:$0xf]
    %v203 = vld [vmem:[%s0 + $0x4] sm:$0xf]
    %v204 = vld [vmem:[%s1] sm:$0xf]
    %v205 = vld [vmem:[%s1 + $0x4] sm:$0xf]
    %v208 = vunpack.c.l.b16 %v202
    %v209 = vunpack.c.l.b16 %v203
    %v210 = vpack.c.b16 %v209, %v208
    %v213 = vunpack.c.l.b16 %v204
    %v214 = vunpack.c.l.b16 %v205
    %v215 = vpack.c.b16 %v214, %v213
    %vm217 = vcmask 130048
    %v219 = vsel %vm217, %v210, 0
    %221 = vmatprep.subr.bf16.mxu0 0
    %222 = vmatpush1.bf16.msra.mxu0 0
    %223 = vmatprep.subr.bf16.mxu0 0
    %224 = vmatpush1.bf16.msra.mxu0 0
    %225 = vmatprep.subr.bf16.mxu0 0
    %226 = vmatpush1.bf16.msra.mxu0 0
    %227 = vmatprep.subr.bf16.mxu0 0
    %228 = vmatpush1.bf16.msra.mxu0 0
    %229 = vmatprep.subr.bf16.mxu0 0
    %230 = vmatpush1.bf16.msra.mxu0 0
    %231 = vmatprep.subr.bf16.mxu0 0
    %232 = vmatpush1.bf16.msra.mxu0 0
    %233 = vmatprep.subr.bf16.mxu0 0
    %234 = vmatpush1.bf16.msra.mxu0 0
    %235 = vmatprep.subr.bf16.mxu0 0
    %236 = vmatpush1.bf16.msra.mxu0 %v215
    %237 = vmatprep.subr.bf16.mxu0 0
    %238 = vmatpush2.bf16.msra.mxu0 0
    %239 = vmatprep.subr.bf16.mxu0 0
    %240 = vmatpush2.bf16.msra.mxu0 0
    %241 = vmatprep.subr.bf16.mxu0 0
    %242 = vmatpush2.bf16.msra.mxu0 0
    %243 = vmatprep.subr.bf16.mxu0 0
    %244 = vmatpush2.bf16.msra.mxu0 0
    %245 = vmatprep.subr.bf16.mxu0 0
    %246 = vmatpush2.bf16.msra.mxu0 0
    %247 = vmatprep.subr.bf16.mxu0 0
    %248 = vmatpush2.bf16.msra.mxu0 0
    %249 = vmatprep.subr.bf16.mxu0 0
    %250 = vmatpush2.bf16.msra.mxu0 0
    %251 = vmatprep.subr.bf16.mxu0 0
    %252 = vmatpush2.bf16.msra.mxu0 0
    %253 = vmatprep.mubr.bf16.mxu0 0
    %254 = vmatmul.mubr.bf16.gmra.mxu0 %v219
    %v255 = vpop.f32.mrf.mxu0
    %v256 = vadd.f32 0.0, %v255
    %v257 = vpop.f32.mrf.mxu0
    %v258 = vpop.f32.mrf.mxu0
    %v259 = vadd.f32 0.0, %v258
    %v260 = vpop.f32.mrf.mxu0
    %261 = vdwg.mxu0
    %v262 = vpack.c.bf16 %v259, %v256
    %v263 = vld [vmem:[#allocation5] sm:$0xf]
    %v264 = vlaneseq
    %v265 = vshrl.u32 %v264, 7
    %v266 = vsub.s32 0, %v265
    %v267 = vrot.slane %v200, %v266
    %vm268 = vcmask 64512
    %v270 = vsel %vm268, %v262, 0
    %vm272 = vcmask 1043456
    %v274 = vsel %vm272, %v263, 0
    %276 = vmatprep.subr.bf16.mxu0 0
    %277 = vmatpush1.bf16.msra.mxu0 0
    %278 = vmatprep.subr.bf16.mxu0 0
    %279 = vmatpush1.bf16.msra.mxu0 0
    %280 = vmatprep.subr.bf16.mxu0 0
    %281 = vmatpush1.bf16.msra.mxu0 0
    %282 = vmatprep.subr.bf16.mxu0 0
    %283 = vmatpush1.bf16.msra.mxu0 0
    %284 = vmatprep.subr.bf16.mxu0 0
    %285 = vmatpush1.bf16.msra.mxu0 0
    %286 = vmatprep.subr.bf16.mxu0 0
    %287 = vmatpush1.bf16.msra.mxu0 0
    %288 = vmatprep.subr.bf16.mxu0 0
    %289 = vmatpush1.bf16.msra.mxu0 0
    %290 = vmatprep.subr.bf16.mxu0 0
    %291 = vmatpush1.bf16.msra.mxu0 %v274
    %292 = vmatprep.subr.bf16.mxu0 0
    %293 = vmatpush2.bf16.msra.mxu0 0
    %294 = vmatprep.subr.bf16.mxu0 0
    %295 = vmatpush2.bf16.msra.mxu0 0
    %296 = vmatprep.subr.bf16.mxu0 0
    %297 = vmatpush2.bf16.msra.mxu0 0
    %298 = vmatprep.subr.bf16.mxu0 0
    %299 = vmatpush2.bf16.msra.mxu0 0
    %300 = vmatprep.subr.bf16.mxu0 0
    %301 = vmatpush2.bf16.msra.mxu0 0
    %302 = vmatprep.subr.bf16.mxu0 0
    %303 = vmatpush2.bf16.msra.mxu0 0
    %304 = vmatprep.subr.bf16.mxu0 0
    %305 = vmatpush2.bf16.msra.mxu0 0
    %306 = vmatprep.subr.bf16.mxu0 0
    %307 = vmatpush2.bf16.msra.mxu0 0
    %308 = vmatprep.mubr.bf16.mxu0 0
    %309 = vmatmul.mubr.bf16.gmra.mxu0 %v270
    %v310 = vpop.f32.mrf.mxu0
    %v311 = vadd.f32 %v267, %v310
    %v312 = vpop.f32.mrf.mxu0
    %v313 = vpop.f32.mrf.mxu0
    %v314 = vadd.f32 %v267, %v313
    %v315 = vpop.f32.mrf.mxu0
    %316 = vdwg.mxu0
    %v317 = vmax.f32 %v311, 0.0
    %v318 = vmax.f32 %v314, 0.0
    %v319 = vpack.c.bf16 %v318, %v317
    %v320 = vld [vmem:[#allocation8] sm:$0xf]
    %v321 = vld [vmem:[#allocation8 + $0x4] sm:$0xf]
    %v322 = vld [vmem:[#allocation8 + $0x8] sm:$0xf]
    %v323 = vld [vmem:[#allocation8 + $0xc] sm:$0xf]
    %v328 = vunpack.c.l.b16 %v320
    %v329 = vunpack.c.l.b16 %v321
    %v330 = vunpack.c.l.b16 %v322
    %v331 = vunpack.c.l.b16 %v323
    %v332 = vpack.c.b16 %v329, %v328
    %v333 = vpack.c.b16 %v331, %v330
    %vm336 = vcmask 261120
    %v338 = vsel %vm336, %v319, 0
    %340 = vmatprep.subr.bf16.mxu0 0
    %341 = vmatpush1.bf16.msra.mxu0 0
    %342 = vmatprep.subr.bf16.mxu0 0
    %343 = vmatpush1.bf16.msra.mxu0 0
    %344 = vmatprep.subr.bf16.mxu0 0
    %345 = vmatpush1.bf16.msra.mxu0 0
    %346 = vmatprep.subr.bf16.mxu0 0
    %347 = vmatpush1.bf16.msra.mxu0 0
    %348 = vmatprep.subr.bf16.mxu0 0
    %349 = vmatpush1.bf16.msra.mxu0 0
    %350 = vmatprep.subr.bf16.mxu0 0
    %351 = vmatpush1.bf16.msra.mxu0 0
    %352 = vmatprep.subr.bf16.mxu0 0
    %353 = vmatpush1.bf16.msra.mxu0 %v333
    %354 = vmatprep.subr.bf16.mxu0 0
    %355 = vmatpush1.bf16.msra.mxu0 %v332
    %356 = vmatprep.subr.bf16.mxu0 0
    %357 = vmatpush2.bf16.msra.mxu0 0
    %358 = vmatprep.subr.bf16.mxu0 0
    %359 = vmatpush2.bf16.msra.mxu0 0
    %360 = vmatprep.subr.bf16.mxu0 0
    %361 = vmatpush2.bf16.msra.mxu0 0
    %362 = vmatprep.subr.bf16.mxu0 0
    %363 = vmatpush2.bf16.msra.mxu0 0
    %364 = vmatprep.subr.bf16.mxu0 0
    %365 = vmatpush2.bf16.msra.mxu0 0
    %366 = vmatprep.subr.bf16.mxu0 0
    %367 = vmatpush2.bf16.msra.mxu0 0
    %368 = vmatprep.subr.bf16.mxu0 0
    %369 = vmatpush2.bf16.msra.mxu0 0
    %370 = vmatprep.subr.bf16.mxu0 0
    %371 = vmatpush2.bf16.msra.mxu0 0
    %372 = vmatprep.mubr.bf16.mxu0 0
    %373 = vmatmul.mubr.bf16.gmra.mxu0 %v338
    %v374 = vpop.f32.mrf.mxu0
    %v375 = vadd.f32 0.0, %v374
    %v376 = vpop.f32.mrf.mxu0
    %v377 = vpop.f32.mrf.mxu0
    %v378 = vadd.f32 0.0, %v377
    %v379 = vpop.f32.mrf.mxu0
    %380 = vdwg.mxu0
    %v381 = vpack.c.bf16 %v378, %v375
    %v382 = vlaneseq
    %v383 = vshrl.u32 %v382, 7
    %v384 = vsub.s32 1, %v383
    %v385 = vrot.slane %v200, %v384
    %386 = vmatprep.subr.bf16.mxu0 0
    %387 = vmatpush1.bf16.msra.mxu0 0
    %388 = vmatprep.subr.bf16.mxu0 0
    %389 = vmatpush1.bf16.msra.mxu0 0
    %390 = vmatprep.subr.bf16.mxu0 0
    %391 = vmatpush1.bf16.msra.mxu0 0
    %392 = vmatprep.subr.bf16.mxu0 0
    %393 = vmatpush1.bf16.msra.mxu0 0
    %394 = vmatprep.subr.bf16.mxu0 0
    %395 = vmatpush1.bf16.msra.mxu0 0
    %396 = vmatprep.subr.bf16.mxu0 0
    %397 = vmatpush1.bf16.msra.mxu0 0
    %398 = vmatprep.subr.bf16.mxu0 0
    %399 = vmatpush1.bf16.msra.mxu0 0
    %400 = vmatprep.subr.bf16.mxu0 0
    %401 = vmatpush1.bf16.msra.mxu0 %v381
    %402 = vmatprep.subr.bf16.mxu0 0
    %403 = vmatpush2.bf16.msra.mxu0 0
    %404 = vmatprep.subr.bf16.mxu0 0
    %405 = vmatpush2.bf16.msra.mxu0 0
    %406 = vmatprep.subr.bf16.mxu0 0
    %407 = vmatpush2.bf16.msra.mxu0 0
    %408 = vmatprep.subr.bf16.mxu0 0
    %409 = vmatpush2.bf16.msra.mxu0 0
    %410 = vmatprep.subr.bf16.mxu0 0
    %411 = vmatpush2.bf16.msra.mxu0 0
    %412 = vmatprep.subr.bf16.mxu0 0
    %413 = vmatpush2.bf16.msra.mxu0 0
    %414 = vmatprep.subr.bf16.mxu0 0
    %415 = vmatpush2.bf16.msra.mxu0 0
    %416 = vmatprep.subr.bf16.mxu0 0
    %417 = vmatpush2.bf16.msra.mxu0 0
    %418 = vmatprep.mubr.bf16.mxu0 0
    %419 = vmatmul.mubr.bf16.gmra.mxu0 %v219
    %v420 = vpop.f32.mrf.mxu0
    %v421 = vadd.f32 %v385, %v420
    %v422 = vpop.f32.mrf.mxu0
    %v423 = vpop.f32.mrf.mxu0
    %v424 = vadd.f32 %v385, %v423
    %v425 = vpop.f32.mrf.mxu0
    %426 = vdwg.mxu0
    %v427 = vmax.f32 %v421, 0.0
    %v428 = vmax.f32 %v424, 0.0
    %v429 = vld [vmem:[%s2] sm:$0x1]
    %v432 = vsel %vm217, %v429, 0
    %434 = vmatprep.subr.bf16.mxu0 0
    %435 = vmatpush1.bf16.msra.mxu0 0
    %436 = vmatprep.subr.bf16.mxu0 0
    %437 = vmatpush1.bf16.msra.mxu0 0
    %438 = vmatprep.subr.bf16.mxu0 0
    %439 = vmatpush1.bf16.msra.mxu0 0
    %440 = vmatprep.subr.bf16.mxu0 0
    %441 = vmatpush1.bf16.msra.mxu0 0
    %442 = vmatprep.subr.bf16.mxu0 0
    %443 = vmatpush1.bf16.msra.mxu0 0
    %444 = vmatprep.subr.bf16.mxu0 0
    %445 = vmatpush1.bf16.msra.mxu0 0
    %446 = vmatprep.subr.bf16.mxu0 0
    %447 = vmatpush1.bf16.msra.mxu0 0
    %448 = vmatprep.subr.bf16.mxu0 0
    %449 = vmatpush1.bf16.msra.mxu0 %v210
    %450 = vmatprep.subr.bf16.mxu0 0
    %451 = vmatpush2.bf16.msra.mxu0 0
    %452 = vmatprep.subr.bf16.mxu0 0
    %453 = vmatpush2.bf16.msra.mxu0 0
    %454 = vmatprep.subr.bf16.mxu0 0
    %455 = vmatpush2.bf16.msra.mxu0 0
    %456 = vmatprep.subr.bf16.mxu0 0
    %457 = vmatpush2.bf16.msra.mxu0 0
    %458 = vmatprep.subr.bf16.mxu0 0
    %459 = vmatpush2.bf16.msra.mxu0 0
    %460 = vmatprep.subr.bf16.mxu0 0
    %461 = vmatpush2.bf16.msra.mxu0 0
    %462 = vmatprep.subr.bf16.mxu0 0
    %463 = vmatpush2.bf16.msra.mxu0 0
    %464 = vmatprep.subr.bf16.mxu0 0
    %465 = vmatpush2.bf16.msra.mxu0 0
    %466 = vmatprep.mubr.bf16.mxu0 0
    %467 = vmatmul.mubr.bf16.gmra.mxu0 %v432
    %v468 = vpop.f32.mrf.mxu0
    %v469 = vadd.f32 0.0, %v468
    %v470 = vpop.f32.mrf.mxu0
    %v471 = vpop.f32.mrf.mxu0
    %v472 = vpop.f32.mrf.mxu0
    %473 = vdwg.mxu0
    %v474 = vpack.c.bf16 %v428, %v427
    %475 = vrot.lane.b32.xlu0 %v332, 96
    %v476 = vpop.permute.xlu0 %475
    %477 = vrot.lane.b32.xlu0 %v333, 96
    %v478 = vpop.permute.xlu0 %477
    %v482 = vsel %vm336, %v474, 0
    %484 = vmatprep.subr.bf16.mxu0 0
    %485 = vmatpush1.bf16.msra.mxu0 0
    %486 = vmatprep.subr.bf16.mxu0 0
    %487 = vmatpush1.bf16.msra.mxu0 0
    %488 = vmatprep.subr.bf16.mxu0 0
    %489 = vmatpush1.bf16.msra.mxu0 0
    %490 = vmatprep.subr.bf16.mxu0 0
    %491 = vmatpush1.bf16.msra.mxu0 0
    %492 = vmatprep.subr.bf16.mxu0 0
    %493 = vmatpush1.bf16.msra.mxu0 0
    %494 = vmatprep.subr.bf16.mxu0 0
    %495 = vmatpush1.bf16.msra.mxu0 0
    %496 = vmatprep.subr.bf16.mxu0 0
    %497 = vmatpush1.bf16.msra.mxu0 %v478
    %498 = vmatprep.subr.bf16.mxu0 0
    %499 = vmatpush1.bf16.msra.mxu0 %v476
    %500 = vmatprep.subr.bf16.mxu0 0
    %501 = vmatpush2.bf16.msra.mxu0 0
    %502 = vmatprep.subr.bf16.mxu0 0
    %503 = vmatpush2.bf16.msra.mxu0 0
    %504 = vmatprep.subr.bf16.mxu0 0
    %505 = vmatpush2.bf16.msra.mxu0 0
    %506 = vmatprep.subr.bf16.mxu0 0
    %507 = vmatpush2.bf16.msra.mxu0 0
    %508 = vmatprep.subr.bf16.mxu0 0
    %509 = vmatpush2.bf16.msra.mxu0 0
    %510 = vmatprep.subr.bf16.mxu0 0
    %511 = vmatpush2.bf16.msra.mxu0 0
    %512 = vmatprep.subr.bf16.mxu0 0
    %513 = vmatpush2.bf16.msra.mxu0 0
    %514 = vmatprep.subr.bf16.mxu0 0
    %515 = vmatpush2.bf16.msra.mxu0 0
    %516 = vmatprep.mubr.bf16.mxu0 0
    %517 = vmatmul.mubr.bf16.gmra.mxu0 %v482
    %v518 = vpop.f32.mrf.mxu0
    %v519 = vadd.f32 0.0, %v518
    %v520 = vpop.f32.mrf.mxu0
    %v521 = vpop.f32.mrf.mxu0
    %v522 = vadd.f32 0.0, %v521
    %v523 = vpop.f32.mrf.mxu0
    %524 = vdwg.mxu0
    %v525 = vpack.c.bf16 %v469, %v469
    %v526 = vpack.c.bf16 %v522, %v519
    %v527 = vlaneseq
    %v528 = vshrl.u32 %v527, 7
    %v529 = vsub.s32 2, %v528
    %v530 = vrot.slane %v200, %v529
    %v532 = vsel %vm217, %v525, 0
    %534 = vmatprep.subr.bf16.mxu0 0
    %535 = vmatpush1.bf16.msra.mxu0 0
    %536 = vmatprep.subr.bf16.mxu0 0
    %537 = vmatpush1.bf16.msra.mxu0 0
    %538 = vmatprep.subr.bf16.mxu0 0
    %539 = vmatpush1.bf16.msra.mxu0 0
    %540 = vmatprep.subr.bf16.mxu0 0
    %541 = vmatpush1.bf16.msra.mxu0 0
    %542 = vmatprep.subr.bf16.mxu0 0
    %543 = vmatpush1.bf16.msra.mxu0 0
    %544 = vmatprep.subr.bf16.mxu0 0
    %545 = vmatpush1.bf16.msra.mxu0 0
    %546 = vmatprep.subr.bf16.mxu0 0
    %547 = vmatpush1.bf16.msra.mxu0 0
    %548 = vmatprep.subr.bf16.mxu0 0
    %549 = vmatpush1.bf16.msra.mxu0 %v526
    %550 = vmatprep.subr.bf16.mxu0 0
    %551 = vmatpush2.bf16.msra.mxu0 0
    %552 = vmatprep.subr.bf16.mxu0 0
    %553 = vmatpush2.bf16.msra.mxu0 0
    %554 = vmatprep.subr.bf16.mxu0 0
    %555 = vmatpush2.bf16.msra.mxu0 0
    %556 = vmatprep.subr.bf16.mxu0 0
    %557 = vmatpush2.bf16.msra.mxu0 0
    %558 = vmatprep.subr.bf16.mxu0 0
    %559 = vmatpush2.bf16.msra.mxu0 0
    %560 = vmatprep.subr.bf16.mxu0 0
    %561 = vmatpush2.bf16.msra.mxu0 0
    %562 = vmatprep.subr.bf16.mxu0 0
    %563 = vmatpush2.bf16.msra.mxu0 0
    %564 = vmatprep.subr.bf16.mxu0 0
    %565 = vmatpush2.bf16.msra.mxu0 0
    %566 = vmatprep.mubr.bf16.mxu0 0
    %567 = vmatmul.mubr.bf16.gmra.mxu0 %v532
    %v568 = vpop.f32.mrf.mxu0
    %v569 = vadd.f32 %v530, %v568
    %v570 = vpop.f32.mrf.mxu0
    %v571 = vpop.f32.mrf.mxu0
    %v572 = vpop.f32.mrf.mxu0
    %573 = vdwg.mxu0
    %v574 = vpack.c.bf16 %v569, %v569
    %v575 = vlaneseq
    %v576 = vshrl.u32 %v575, 7
    %v577 = vsub.s32 3, %v576
    %v578 = vrot.slane %v200, %v577
    %579 = vrot.lane.b32.xlu0 %v332, 64
    %v580 = vpop.permute.xlu0 %579
    %581 = vrot.lane.b32.xlu0 %v333, 64
    %v582 = vpop.permute.xlu0 %581
    %v586 = vsel %vm336, %v574, 0
    %588 = vmatprep.subr.bf16.mxu0 0
    %589 = vmatpush1.bf16.msra.mxu0 0
    %590 = vmatprep.subr.bf16.mxu0 0
    %591 = vmatpush1.bf16.msra.mxu0 0
    %592 = vmatprep.subr.bf16.mxu0 0
    %593 = vmatpush1.bf16.msra.mxu0 0
    %594 = vmatprep.subr.bf16.mxu0 0
    %595 = vmatpush1.bf16.msra.mxu0 0
    %596 = vmatprep.subr.bf16.mxu0 0
    %597 = vmatpush1.bf16.msra.mxu0 0
    %598 = vmatprep.subr.bf16.mxu0 0
    %599 = vmatpush1.bf16.msra.mxu0 0
    %600 = vmatprep.subr.bf16.mxu0 0
    %601 = vmatpush1.bf16.msra.mxu0 %v582
    %602 = vmatprep.subr.bf16.mxu0 0
    %603 = vmatpush1.bf16.msra.mxu0 %v580
    %604 = vmatprep.subr.bf16.mxu0 0
    %605 = vmatpush2.bf16.msra.mxu0 0
    %606 = vmatprep.subr.bf16.mxu0 0
    %607 = vmatpush2.bf16.msra.mxu0 0
    %608 = vmatprep.subr.bf16.mxu0 0
    %609 = vmatpush2.bf16.msra.mxu0 0
    %610 = vmatprep.subr.bf16.mxu0 0
    %611 = vmatpush2.bf16.msra.mxu0 0
    %612 = vmatprep.subr.bf16.mxu0 0
    %613 = vmatpush2.bf16.msra.mxu0 0
    %614 = vmatprep.subr.bf16.mxu0 0
    %615 = vmatpush2.bf16.msra.mxu0 0
    %616 = vmatprep.subr.bf16.mxu0 0
    %617 = vmatpush2.bf16.msra.mxu0 0
    %618 = vmatprep.subr.bf16.mxu0 0
    %619 = vmatpush2.bf16.msra.mxu0 0
    %620 = vmatprep.mubr.bf16.mxu0 0
    %621 = vmatmul.mubr.bf16.gmra.mxu0 %v586
    %v622 = vpop.f32.mrf.mxu0
    %v623 = vadd.f32 %v578, %v622
    %v624 = vpop.f32.mrf.mxu0
    %v625 = vpop.f32.mrf.mxu0
    %v626 = vpop.f32.mrf.mxu0
    %627 = vdwg.mxu0
    %v628 = vmax.f32 %v623, 0.0
    %v629 = vpack.c.bf16 %v628, %v628
    %v630 = vlaneseq
    %v631 = vshrl.u32 %v630, 7
    %v632 = vsub.s32 4, %v631
    %v633 = vrot.slane %v200, %v632
    %634 = vrot.lane.b32.xlu0 %v332, 32
    %v635 = vpop.permute.xlu0 %634
    %636 = vrot.lane.b32.xlu0 %v333, 32
    %v637 = vpop.permute.xlu0 %636
    %v641 = vsel %vm336, %v629, 0
    %643 = vmatprep.subr.bf16.mxu0 0
    %644 = vmatpush1.bf16.msra.mxu0 0
    %645 = vmatprep.subr.bf16.mxu0 0
    %646 = vmatpush1.bf16.msra.mxu0 0
    %647 = vmatprep.subr.bf16.mxu0 0
    %648 = vmatpush1.bf16.msra.mxu0 0
    %649 = vmatprep.subr.bf16.mxu0 0
    %650 = vmatpush1.bf16.msra.mxu0 0
    %651 = vmatprep.subr.bf16.mxu0 0
    %652 = vmatpush1.bf16.msra.mxu0 0
    %653 = vmatprep.subr.bf16.mxu0 0
    %654 = vmatpush1.bf16.msra.mxu0 0
    %655 = vmatprep.subr.bf16.mxu0 0
    %656 = vmatpush1.bf16.msra.mxu0 %v637
    %657 = vmatprep.subr.bf16.mxu0 0
    %658 = vmatpush1.bf16.msra.mxu0 %v635
    %659 = vmatprep.subr.bf16.mxu0 0
    %660 = vmatpush2.bf16.msra.mxu0 0
    %661 = vmatprep.subr.bf16.mxu0 0
    %662 = vmatpush2.bf16.msra.mxu0 0
    %663 = vmatprep.subr.bf16.mxu0 0
    %664 = vmatpush2.bf16.msra.mxu0 0
    %665 = vmatprep.subr.bf16.mxu0 0
    %666 = vmatpush2.bf16.msra.mxu0 0
    %667 = vmatprep.subr.bf16.mxu0 0
    %668 = vmatpush2.bf16.msra.mxu0 0
    %669 = vmatprep.subr.bf16.mxu0 0
    %670 = vmatpush2.bf16.msra.mxu0 0
    %671 = vmatprep.subr.bf16.mxu0 0
    %672 = vmatpush2.bf16.msra.mxu0 0
    %673 = vmatprep.subr.bf16.mxu0 0
    %674 = vmatpush2.bf16.msra.mxu0 0
    %675 = vmatprep.mubr.bf16.mxu0 0
    %676 = vmatmul.mubr.bf16.gmra.mxu0 %v641
    %v677 = vpop.f32.mrf.mxu0
    %v678 = vadd.f32 %v633, %v677
    %v679 = vpop.f32.mrf.mxu0
    %v680 = vpop.f32.mrf.mxu0
    %v681 = vpop.f32.mrf.mxu0
    %682 = vdwg.mxu0
    %v683 = vmax.f32 %v678, 0.0
    %v684 = vpack.c.bf16 %v683, %v683
    %v685 = vld [vmem:[#allocation10] sm:$0xf]
    %v686 = vld [vmem:[#allocation10 + $0x4] sm:$0xf]
    %v687 = vlaneseq
    %v688 = vshrl.u32 %v687, 7
    %v689 = vsub.s32 5, %v688
    %v690 = vrot.slane %v200, %v689
    %v693 = vunpack.c.l.b16 %v685
    %v694 = vunpack.c.l.b16 %v686
    %v695 = vpack.c.b16 %v694, %v693
    %v697 = vsel %vm336, %v684, 0
    %v700 = vsel %vm336, %v695, 0
    %702 = vmatprep.subr.bf16.mxu0 0
    %703 = vmatpush1.bf16.xpose.msra.mxu0 0
    %704 = vmatprep.subr.bf16.mxu0 0
    %705 = vmatpush1.bf16.xpose.msra.mxu0 0
    %706 = vmatprep.subr.bf16.mxu0 0
    %707 = vmatpush1.bf16.xpose.msra.mxu0 0
    %708 = vmatprep.subr.bf16.mxu0 0
    %709 = vmatpush1.bf16.xpose.msra.mxu0 0
    %710 = vmatprep.subr.bf16.mxu0 0
    %711 = vmatpush1.bf16.xpose.msra.mxu0 0
    %712 = vmatprep.subr.bf16.mxu0 0
    %713 = vmatpush1.bf16.xpose.msra.mxu0 0
    %714 = vmatprep.subr.bf16.mxu0 0
    %715 = vmatpush1.bf16.xpose.msra.mxu0 0
    %716 = vmatprep.subr.bf16.mxu0 0
    %717 = vmatpush1.bf16.xpose.msra.mxu0 %v700
    %718 = vmatprep.subr.bf16.mxu0 0
    %719 = vmatpush2.bf16.xpose.msra.mxu0 0
    %720 = vmatprep.subr.bf16.mxu0 0
    %721 = vmatpush2.bf16.xpose.msra.mxu0 0
    %722 = vmatprep.subr.bf16.mxu0 0
    %723 = vmatpush2.bf16.xpose.msra.mxu0 0
    %724 = vmatprep.subr.bf16.mxu0 0
    %725 = vmatpush2.bf16.xpose.msra.mxu0 0
    %726 = vmatprep.subr.bf16.mxu0 0
    %727 = vmatpush2.bf16.xpose.msra.mxu0 0
    %728 = vmatprep.subr.bf16.mxu0 0
    %729 = vmatpush2.bf16.xpose.msra.mxu0 0
    %730 = vmatprep.subr.bf16.mxu0 0
    %731 = vmatpush2.bf16.xpose.msra.mxu0 0
    %732 = vmatprep.subr.bf16.mxu0 0
    %733 = vmatpush2.bf16.xpose.msra.mxu0 0
    %734 = vmatprep.mubr.bf16.mxu0 0
    %735 = vmatmul.mubr.bf16.gmra.mxu0 %v697
    %v736 = vpop.f32.mrf.mxu0
    %v737 = vadd.f32 %v690, %v736
    %v738 = vpop.f32.mrf.mxu0
    %v739 = vpop.f32.mrf.mxu0
    %v740 = vpop.f32.mrf.mxu0
    %741 = vdwg.mxu0
    %vm742 = vcmask 123904
    %v743 = vsel %vm742, %v737, 0.0
    %744 = vadd.xlane.f32.xlu0 %v743
    %v745 = vpop.xlane.xlu0 %744
    %v746 = vrcp.pop 16.0
    %v747 = vmul.f32 %v745, %v746
    %v748 = vsub.f32 %v737, %v747
    %v749 = vmul.f32 %v748, %v748
    %v750 = vsel %vm742, %v749, 0.0
    %751 = vadd.xlane.f32.xlu0 %v750
    %v752 = vpop.xlane.xlu0 %751
    %v753 = vmul.f32 %v752, %v746
    %v754 = vadd.f32 %v753, 1e-05
    %v755 = vrsqrt.pop %v754
    %v756 = vmul.f32 %v748, %v755
    %v757 = vlaneseq
    %v758 = vshrl.u32 %v757, 7
    %v759 = vsub.s32 6, %v758
    %v760 = vrot.slane %v200, %v759
    %v761 = vmul.f32 %v756, %v760
    %v762 = vlaneseq
    %v763 = vshrl.u32 %v762, 7
    %v764 = vsub.s32 7, %v763
    %v765 = vrot.slane %v200, %v764
    %v766 = vadd.f32 %v761, %v765
    %v767 = vstv %s198
    %v768 = vmul.f32 %v767, 1.442695
    %v769 = vpow.pop %v768
    %s770 = vtos %v769
    %v771 = vstv %s770
    %v772 = vmul.f32 %v766, %v771
    %s773 = smul.u32 4, 2
    %s774 = smul.u32 %s773, 6
    %s775 = sshll.u32 %s774, 4
    %776 = dma.done [#allocation4], %s775
    %s777 = smul.u32 1, 6
    %s778 = sshll.u32 %s777, 4
    %779 = dma.done %s151, %s778
    %v780 = vld [vmem:[#allocation3] sm:$0x3f]
    %v781 = vld [vmem:[#allocation2] sm:$0xff]
    %v782 = vld [vmem:[#allocation2 + $0x8] sm:$0xff]
    %v783 = vld [vmem:[#allocation2 + $0x10] sm:$0xff]
    %v784 = vld [vmem:[#allocation2 + $0x18] sm:$0xff]
    %v785 = vld [vmem:[#allocation2 + $0x20] sm:$0xff]
    %v786 = vld [vmem:[#allocation2 + $0x28] sm:$0xff]
    %v787 = vlaneseq
    %v788 = vshrl.u32 %v787, 7
    %v789 = vsub.s32 0, %v788
    %v790 = vrot.slane %v201, %v789
    %v792 = vcombine.high %v780, %v780
    %v794 = vunpack.c.l.s4 1966171168
    %v795 = vunpack.c.0.s8 %v794
    %v796 = vlaneseq
    %v797 = vshrl.u32 %v796, 7
    %v798 = vsub.s32 %v795, %v797
    %v799 = vrot.slane %v780, %v798
    %v801 = vunpack.c.l.s4 1966171168
    %v802 = vunpack.c.0.s8 %v801
    %v803 = vlaneseq
    %v804 = vshrl.u32 %v803, 7
    %v805 = vsub.s32 %v802, %v804
    %v806 = vrot.slane %v792, %v805
    %v807 = vcombine.high %v799, %v799
    %v808 = vcombine.high %v806, %v806
    %v810 = vunpack.c.l.s4 1966171168
    %v811 = vunpack.c.0.s8 %v810
    %v812 = vlaneseq
    %v813 = vshrl.u32 %v812, 7
    %v814 = vsub.s32 %v811, %v813
    %v815 = vrot.slane %v799, %v814
    %v817 = vunpack.c.l.s4 1966171168
    %v818 = vunpack.c.0.s8 %v817
    %v819 = vlaneseq
    %v820 = vshrl.u32 %v819, 7
    %v821 = vsub.s32 %v818, %v820
    %v822 = vrot.slane %v806, %v821
    %v824 = vunpack.c.l.s4 1966171168
    %v825 = vunpack.c.0.s8 %v824
    %v826 = vlaneseq
    %v827 = vshrl.u32 %v826, 7
    %v828 = vsub.s32 %v825, %v827
    %v829 = vrot.slane %v807, %v828
    %v831 = vunpack.c.l.s4 1966171168
    %v832 = vunpack.c.0.s8 %v831
    %v833 = vlaneseq
    %v834 = vshrl.u32 %v833, 7
    %v835 = vsub.s32 %v832, %v834
    %v836 = vrot.slane %v808, %v835
    %v837 = vcombine.high %v815, %v815
    %v838 = vcombine.high %v829, %v829
    %v851 = vunpack.c.l.b16 %v781
    %v852 = vunpack.c.h.b16 %v781
    %v853 = vunpack.c.l.b16 %v782
    %v854 = vunpack.c.h.b16 %v782
    %v855 = vunpack.c.l.b16 %v783
    %v856 = vunpack.c.h.b16 %v783
    %v857 = vunpack.c.l.b16 %v784
    %v858 = vunpack.c.h.b16 %v784
    %v859 = vunpack.c.l.b16 %v785
    %v860 = vunpack.c.h.b16 %v785
    %v861 = vunpack.c.l.b16 %v786
    %v862 = vunpack.c.h.b16 %v786
    %v863 = vpack.c.b16 %v857, %v851
    %v864 = vpack.c.b16 %v858, %v852
    %v865 = vpack.c.b16 %v859, %v853
    %v866 = vpack.c.b16 %v860, %v854
    %v867 = vpack.c.b16 %v861, %v855
    %v868 = vpack.c.b16 %v862, %v856
    %875 = vmatprep.subr.bf16.mxu0 0
    %876 = vmatpush1.bf16.xpose.msra.mxu0 0
    %877 = vmatprep.subr.bf16.mxu0 0
    %878 = vmatpush1.bf16.xpose.msra.mxu0 0
    %879 = vmatprep.subr.bf16.mxu0 0
    %880 = vmatpush1.bf16.xpose.msra.mxu0 0
    %881 = vmatprep.subr.bf16.mxu0 0
    %882 = vmatpush1.bf16.xpose.msra.mxu0 0
    %883 = vmatprep.subr.bf16.mxu0 0
    %884 = vmatpush1.bf16.xpose.msra.mxu0 0
    %885 = vmatprep.subr.bf16.mxu0 0
    %886 = vmatpush1.bf16.xpose.msra.mxu0 0
    %887 = vmatprep.subr.bf16.mxu0 0
    %888 = vmatpush1.bf16.xpose.msra.mxu0 0
    %889 = vmatprep.subr.bf16.mxu0 %v864
    %890 = vmatpush1.bf16.xpose.msra.mxu0 %v863
    %891 = vmatprep.subr.bf16.mxu0 0
    %892 = vmatpush2.bf16.xpose.msra.mxu0 0
    %893 = vmatprep.subr.bf16.mxu0 0
    %894 = vmatpush2.bf16.xpose.msra.mxu0 0
    %895 = vmatprep.subr.bf16.mxu0 0
    %896 = vmatpush2.bf16.xpose.msra.mxu0 0
    %897 = vmatprep.subr.bf16.mxu0 0
    %898 = vmatpush2.bf16.xpose.msra.mxu0 0
    %899 = vmatprep.subr.bf16.mxu0 0
    %900 = vmatpush2.bf16.xpose.msra.mxu0 0
    %901 = vmatprep.subr.bf16.mxu0 0
    %902 = vmatpush2.bf16.xpose.msra.mxu0 0
    %903 = vmatprep.subr.bf16.mxu0 0
    %904 = vmatpush2.bf16.xpose.msra.mxu0 0
    %905 = vmatprep.subr.bf16.mxu0 0
    %906 = vmatpush2.bf16.xpose.msra.mxu0 0
    %907 = vmatprep.mubr.bf16.mxu0 %v829
    %908 = vmatmul.mubr.bf16.gmra.mxu0 %v815
    %v909 = vpop.f32.mrf.mxu0
    %v910 = vadd.f32 %v790, %v909
    %v911 = vpop.f32.mrf.mxu0
    %v912 = vpop.f32.mrf.mxu0
    %v913 = vpop.f32.mrf.mxu0
    %914 = vdwg.mxu0
    %915 = vmatprep.subr.bf16.mxu0 0
    %916 = vmatpush1.bf16.xpose.msra.mxu0 0
    %917 = vmatprep.subr.bf16.mxu0 0
    %918 = vmatpush1.bf16.xpose.msra.mxu0 0
    %919 = vmatprep.subr.bf16.mxu0 0
    %920 = vmatpush1.bf16.xpose.msra.mxu0 0
    %921 = vmatprep.subr.bf16.mxu0 0
    %922 = vmatpush1.bf16.xpose.msra.mxu0 0
    %923 = vmatprep.subr.bf16.mxu0 0
    %924 = vmatpush1.bf16.xpose.msra.mxu0 0
    %925 = vmatprep.subr.bf16.mxu0 0
    %926 = vmatpush1.bf16.xpose.msra.mxu0 0
    %927 = vmatprep.subr.bf16.mxu0 0
    %928 = vmatpush1.bf16.xpose.msra.mxu0 0
    %929 = vmatprep.subr.bf16.mxu0 %v866
    %930 = vmatpush1.bf16.xpose.msra.mxu0 %v865
    %931 = vmatprep.subr.bf16.mxu0 0
    %932 = vmatpush2.bf16.xpose.msra.mxu0 0
    %933 = vmatprep.subr.bf16.mxu0 0
    %934 = vmatpush2.bf16.xpose.msra.mxu0 0
    %935 = vmatprep.subr.bf16.mxu0 0
    %936 = vmatpush2.bf16.xpose.msra.mxu0 0
    %937 = vmatprep.subr.bf16.mxu0 0
    %938 = vmatpush2.bf16.xpose.msra.mxu0 0
    %939 = vmatprep.subr.bf16.mxu0 0
    %940 = vmatpush2.bf16.xpose.msra.mxu0 0
    %941 = vmatprep.subr.bf16.mxu0 0
    %942 = vmatpush2.bf16.xpose.msra.mxu0 0
    %943 = vmatprep.subr.bf16.mxu0 0
    %944 = vmatpush2.bf16.xpose.msra.mxu0 0
    %945 = vmatprep.subr.bf16.mxu0 0
    %946 = vmatpush2.bf16.xpose.msra.mxu0 0
    %947 = vmatprep.mubr.bf16.mxu0 %v838
    %948 = vmatmul.mubr.bf16.gmra.mxu0 %v837
    %v949 = vpop.f32.mrf.mxu0
    %v950 = vadd.f32 %v910, %v949
    %v951 = vpop.f32.mrf.mxu0
    %v952 = vpop.f32.mrf.mxu0
    %v953 = vpop.f32.mrf.mxu0
    %954 = vdwg.mxu0
    %955 = vmatprep.subr.bf16.mxu0 0
    %956 = vmatpush1.bf16.xpose.msra.mxu0 0
    %957 = vmatprep.subr.bf16.mxu0 0
    %958 = vmatpush1.bf16.xpose.msra.mxu0 0
    %959 = vmatprep.subr.bf16.mxu0 0
    %960 = vmatpush1.bf16.xpose.msra.mxu0 0
    %961 = vmatprep.subr.bf16.mxu0 0
    %962 = vmatpush1.bf16.xpose.msra.mxu0 0
    %963 = vmatprep.subr.bf16.mxu0 0
    %964 = vmatpush1.bf16.xpose.msra.mxu0 0
    %965 = vmatprep.subr.bf16.mxu0 0
    %966 = vmatpush1.bf16.xpose.msra.mxu0 0
    %967 = vmatprep.subr.bf16.mxu0 0
    %968 = vmatpush1.bf16.xpose.msra.mxu0 0
    %969 = vmatprep.subr.bf16.mxu0 %v868
    %970 = vmatpush1.bf16.xpose.msra.mxu0 %v867
    %971 = vmatprep.subr.bf16.mxu0 0
    %972 = vmatpush2.bf16.xpose.msra.mxu0 0
    %973 = vmatprep.subr.bf16.mxu0 0
    %974 = vmatpush2.bf16.xpose.msra.mxu0 0
    %975 = vmatprep.subr.bf16.mxu0 0
    %976 = vmatpush2.bf16.xpose.msra.mxu0 0
    %977 = vmatprep.subr.bf16.mxu0 0
    %978 = vmatpush2.bf16.xpose.msra.mxu0 0
    %979 = vmatprep.subr.bf16.mxu0 0
    %980 = vmatpush2.bf16.xpose.msra.mxu0 0
    %981 = vmatprep.subr.bf16.mxu0 0
    %982 = vmatpush2.bf16.xpose.msra.mxu0 0
    %983 = vmatprep.subr.bf16.mxu0 0
    %984 = vmatpush2.bf16.xpose.msra.mxu0 0
    %985 = vmatprep.subr.bf16.mxu0 0
    %986 = vmatpush2.bf16.xpose.msra.mxu0 0
    %987 = vmatprep.mubr.bf16.mxu0 %v836
    %988 = vmatmul.mubr.bf16.gmra.mxu0 %v822
    %v989 = vpop.f32.mrf.mxu0
    %v990 = vadd.f32 %v950, %v989
    %v991 = vpop.f32.mrf.mxu0
    %v992 = vpop.f32.mrf.mxu0
    %v993 = vpop.f32.mrf.mxu0
    %994 = vdwg.mxu0
    %v995 = vsel %vm742, %v990, 0.0
    %996 = vadd.xlane.f32.xlu0 %v995
    %v997 = vpop.xlane.xlu0 %996
    %v998 = vmul.f32 %v997, %v746
    %v999 = vsub.f32 %v990, %v998
    %v1000 = vmul.f32 %v999, %v999
    %v1001 = vsel %vm742, %v1000, 0.0
    %1002 = vadd.xlane.f32.xlu0 %v1001
    %v1003 = vpop.xlane.xlu0 %1002
    %v1004 = vmul.f32 %v1003, %v746
    %v1005 = vadd.f32 %v1004, 1e-05
    %v1006 = vrsqrt.pop %v1005
    %v1007 = vmul.f32 %v999, %v1006
    %v1008 = vlaneseq
    %v1009 = vshrl.u32 %v1008, 7
    %v1010 = vsub.s32 1, %v1009
    %v1011 = vrot.slane %v201, %v1010
    %v1012 = vmul.f32 %v1007, %v1011
    %v1013 = vlaneseq
    %v1014 = vshrl.u32 %v1013, 7
    %v1015 = vsub.s32 2, %v1014
    %v1016 = vrot.slane %v201, %v1015
    %v1017 = vadd.f32 %v1012, %v1016
    %v1018 = vstv %s199
    %v1019 = vmul.f32 %v1018, 1.442695
    %v1020 = vpow.pop %v1019
    %s1021 = vtos %v1020
    %v1022 = vstv %s1021
    %v1023 = vmul.f32 %v1017, %v1022
    %v1025 = vrot.slane %v1023, 6
    %vm1027 = vcmask 1041408
    %v1028 = vsel %vm1027, %v772, %v1025
    %vm1029 = vcmask 125952
    %1030 = vst.msk [vmem:[%s10] sm:$0xf] %vm1029, %v1028
    // Predicated region
    $region118: #{model_forward.1} parent=1 // pred_check
      _
    $region119: #{model_forward.1} parent=1 // pred_check_branch
      %1032 = sbr.rel (0) target = $region121
    $region120: #{model_forward.1} parent=1 // pred_region
      _
    $region121: #{model_forward.1} parent=1 // pred_fallthru
      _
    // Predicated region
    $region122: #{model_forward.1} parent=1 // pred_check
      _
    $region123: #{model_forward.1} parent=1 // pred_check_branch
      %1034 = sbr.rel (0) target = $region125
    $region124: #{model_forward.1} parent=1 // pred_region
      _
    $region125: #{model_forward.1} parent=1 // pred_fallthru
      _
    %1035 = vsyncpa [#allocation6], 1
    %1036 = vsyncpa [#allocation9], 1
    %1037 = vsyncpa [#allocation12], 1
    %1038 = vsyncpa [#allocation7], 1
  %1039 = vsyncmov [#allocation4]
  %s1040 = vpop.sfrf %1039
  %p1041 = scmp.eq.s32.totalorder %s1040, 0
  %p1042 = pneg %p1041
  %1044 = shalt.err (%p1042)
  %s1045 = scalar_lea.sflag [#allocation4], 1
  %1046 = vsyncmov %s1045
  %s1047 = vpop.sfrf %1046
  %p1048 = scmp.eq.s32.totalorder %s1047, 0
  %p1049 = pneg %p1048
  %1051 = shalt.err (%p1049)

</llo_original>
